<compile_context>
chip_gen: v6e
topology: v6e:2x2x1
jax: 0.10.0
libtpu: 0.0.40
codegen_flags: <defaults>
</compile_context>

<pallas_src>
import jax
import jax.numpy as jnp
import numpy as np
from jax import lax
from jax.experimental import pallas as pl
from jax.experimental.pallas import tpu as pltpu

KSIZE = 7
PAD = 3


def _reflect_index(i, n):
    """torch / numpy 'reflect' (edge not repeated) index for i in [-PAD, n+PAD)."""
    if i < 0:
        return -i
    if i >= n:
        return 2 * n - 2 - i
    return i


def _spatial_attention_kernel(x_ref, r_ref, m_ref, b_ref, o_ref):
    # x_ref : (C, H, W)      one batch element, NCHW (W on the lane axis)
    # r_ref : (H+6, H)       0/1 H-direction reflect-pad row-selection matrix
    # m_ref : (2, 7, W, W)   banded W-conv matrices (kw taps + W reflect pad);
    #                        index 0 = avg plane (1/C folded in), 1 = max plane
    # b_ref : (1,)           SMEM bias scalar
    # o_ref : (H, W)
    C, H, W = x_ref.shape

    # Channel reduction without materializing a full f32 copy of the tile:
    # running max in the input dtype (exact), running sum accumulated in f32.
    x_max = x_ref[0]
    x_sum = x_ref[0].astype(jnp.float32)
    for c in range(1, C):
        xc = x_ref[c]
        x_max = jnp.maximum(x_max, xc)
        x_sum = x_sum + xc.astype(jnp.float32)
    x_max = x_max.astype(jnp.float32)

    # H-direction reflect padding as a tiny MXU matmul (exact 0/1 selection).
    rmat = r_ref[...]                                                  # (H+6, H)
    hp_avg = jnp.dot(rmat, x_sum, preferred_element_type=jnp.float32)  # (H+6, W)
    hp_max = jnp.dot(rmat, x_max, preferred_element_type=jnp.float32)  # (H+6, W)

    # 7x7 conv: for each kh row offset, one banded matmul along W per plane.
    # Bias is folded into acc0's init; two accumulators for ILP.
    acc0 = jnp.full((H, W), b_ref[0], dtype=jnp.float32)
    acc1 = jnp.zeros((H, W), dtype=jnp.float32)
    for kh in range(KSIZE):
        acc0 = acc0 + jnp.dot(hp_avg[kh:kh + H, :], m_ref[0, kh],
                              preferred_element_type=jnp.float32)
        acc1 = acc1 + jnp.dot(hp_max[kh:kh + H, :], m_ref[1, kh],
                              preferred_element_type=jnp.float32)

    o_ref[...] = (acc0 + acc1).astype(o_ref.dtype)


def spatial_attention(x, weight, bias):
    """Pallas version of SpatialAttention.forward.

    x      : (B, C, H, W)   NCHW, like the PyTorch module
    weight : (1, 2, 7, 7)   Conv2d(2, 1, 7) weight (OIHW)
    bias   : (1,)           Conv2d bias
    returns: (B, 1, H, W)
    """
    B, C, H, W = x.shape
    assert weight.shape == (1, 2, KSIZE, KSIZE), weight.shape
    assert C >= 1
    assert H >= PAD + 1 and W >= PAD + 1, (
        "reflect padding requires H, W >= 4 (torch 'reflect' semantics)")

    # Constant (H+6, H) 0/1 matrix: row r of the H-padded plane = source row
    # reflect(r - 3, H) of the unpadded plane.
    r_np = np.zeros((H + 2 * PAD, H), np.float32)
    for r in range(H + 2 * PAD):
        r_np[r, _reflect_index(r - PAD, H)] = 1.0

    # Constant (7, W, W) selection tensor: sel[kw, src, w] = 1 iff padded column
    # (w + kw) reflects back to source column `src`.  Contracting it with the
    # per-(channel, kh) kw taps gives banded (W, W) matrices that implement both
    # the kw taps and the W-direction reflect padding as a single matmul.
    sel_np = np.zeros((KSIZE, W, W), np.float32)
    for kw in range(KSIZE):
        for w in range(W):
            sel_np[kw, _reflect_index(w + kw - PAD, W), w] += 1.0

    # Fold the 1/C mean factor into the avg-channel taps (conv is linear).
    w2 = weight.reshape(2, KSIZE, KSIZE).astype(jnp.float32)
    w2 = w2 * jnp.array([1.0 / C, 1.0], jnp.float32)[:, None, None]
    m = jnp.einsum("chk,ksw->chsw", w2, jnp.asarray(sel_np),
                   precision=lax.Precision.HIGHEST)            # (2, 7, W, W)

    r_mat = jnp.asarray(r_np)
    b_vec = bias.reshape(1).astype(jnp.float32)

    return pl.pallas_call(
        _spatial_attention_kernel,
        out_shape=jax.ShapeDtypeStruct((B, 1, H, W), x.dtype),
        grid_spec=pltpu.PrefetchScalarGridSpec(
            num_scalar_prefetch=0,
            grid=(B,),
            in_specs=[
                pl.BlockSpec((None, C, H, W), lambda b: (b, 0, 0, 0)),
                pl.BlockSpec((H + 2 * PAD, H), lambda b: (0, 0)),
                pl.BlockSpec((2, KSIZE, W, W), lambda b: (0, 0, 0, 0)),
                pl.BlockSpec(memory_space=pltpu.MemorySpace.SMEM),
            ],
            out_specs=pl.BlockSpec((None, None, H, W),
                                   lambda b: (b, 0, 0, 0)),
        ),
        compiler_params=pltpu.CompilerParams(
            dimension_semantics=("parallel",)),
    )(x, r_mat, m, b_vec)


def _reference(x, weight, bias):
    """Pure-JAX elementwise reference (exact f32, no MXU precision ambiguity)."""
    B, C, H, W = x.shape
    xf = x.astype(jnp.float32)
    planes = jnp.stack([jnp.mean(xf, axis=1), jnp.max(xf, axis=1)], axis=1)
    p = jnp.pad(planes, ((0, 0), (0, 0), (PAD, PAD), (PAD, PAD)),
                mode="reflect")                                 # (B, 2, H+6, W+6)
    out = jnp.zeros((B, H, W), jnp.float32) + bias.astype(jnp.float32)[0]
    wf = weight.astype(jnp.float32)
    for c in range(2):
        for kh in range(KSIZE):
            for kw in range(KSIZE):
                out = out + wf[0, c, kh, kw] * p[:, c, kh:kh + H, kw:kw + W]
    return out[:, None, :, :].astype(x.dtype)


if __name__ == "__main__":
    B, C, H, W = 2, 4, 16, 16

    key = jax.random.PRNGKey(0)
    kx, kwt, kb = jax.random.split(key, 3)

    x = jax.random.normal(kx, (B, C, H, W), jnp.float32)

    # Deterministic synthetic parameters (Conv2d default-style uniform init).
    fan_in = 2 * KSIZE * KSIZE
    bound = 1.0 / (fan_in ** 0.5)
    weight = jax.random.uniform(kwt, (1, 2, KSIZE, KSIZE), jnp.float32,
                                minval=-bound, maxval=bound)
    bias = jax.random.uniform(kb, (1,), jnp.float32,
                              minval=-bound, maxval=bound)

    out = spatial_attention(x, weight, bias)
    out = jax.block_until_ready(out)

    ref = _reference(x, weight, bias)
    assert out.shape == (B, 1, H, W)
    err = float(jnp.max(jnp.abs(out - ref)))
    assert err < 1e-4, f"max abs error {err}"

    print("KERNEL_OK")
</pallas_src>

<mosaic_0001>
module attributes {stable_mosaic.version = 11 : i64} {
  func.func @_spatial_attention_kernel(%arg0: i32, %arg1: memref<1x4x16x16xf32, #tpu.memory_space<vmem>>, %arg2: memref<22x16xf32, #tpu.memory_space<vmem>>, %arg3: memref<2x7x16x16xf32, #tpu.memory_space<vmem>>, %arg4: memref<1xf32, #tpu.memory_space<smem>>, %arg5: memref<1x1x16x16xf32, #tpu.memory_space<vmem>>) attributes {dimension_semantics = [#tpu.dimension_semantics<parallel>], iteration_bounds = array<i64: 2>, scalar_prefetch = 0 : i64, scratch_operands = 0 : i64, tpu.core_type = #tpu.core_type<tc>, window_params = [{transform_indices = @transform_0, window_bounds = array<i64: 1, 4, 16, 16>}, {pipeline_mode = #tpu.pipeline_mode<synchronous>, transform_indices = @transform_1, window_bounds = array<i64: 22, 16>}, {pipeline_mode = #tpu.pipeline_mode<synchronous>, transform_indices = @transform_2, window_bounds = array<i64: 2, 7, 16, 16>}, {transform_indices = @transform_3, window_bounds = array<i64: 1>}, {transform_indices = @transform_4, window_bounds = array<i64: 1, 1, 16, 16>}]} {
    %c0 = arith.constant 0 : index
    %c0_0 = arith.constant 0 : index
    %c0_1 = arith.constant 0 : index
    %c0_2 = arith.constant 0 : index
    %0 = vector.load %arg1[%c0, %c0_0, %c0_1, %c0_2] : memref<1x4x16x16xf32, #tpu.memory_space<vmem>>, vector<1x1x16x16xf32>
    %1 = vector.shape_cast %0 : vector<1x1x16x16xf32> to vector<16x16xf32>
    %c0_3 = arith.constant 0 : index
    %c0_4 = arith.constant 0 : index
    %c0_5 = arith.constant 0 : index
    %c0_6 = arith.constant 0 : index
    %2 = vector.load %arg1[%c0_3, %c0_4, %c0_5, %c0_6] : memref<1x4x16x16xf32, #tpu.memory_space<vmem>>, vector<1x1x16x16xf32>
    %3 = vector.shape_cast %2 : vector<1x1x16x16xf32> to vector<16x16xf32>
    %c0_7 = arith.constant 0 : index
    %c1 = arith.constant 1 : index
    %c0_8 = arith.constant 0 : index
    %c0_9 = arith.constant 0 : index
    %4 = vector.load %arg1[%c0_7, %c1, %c0_8, %c0_9] : memref<1x4x16x16xf32, #tpu.memory_space<vmem>>, vector<1x1x16x16xf32>
    %5 = vector.shape_cast %4 : vector<1x1x16x16xf32> to vector<16x16xf32>
    %6 = arith.maximumf %1, %5 : vector<16x16xf32>
    %7 = arith.addf %3, %5 : vector<16x16xf32>
    %c0_10 = arith.constant 0 : index
    %c2 = arith.constant 2 : index
    %c0_11 = arith.constant 0 : index
    %c0_12 = arith.constant 0 : index
    %8 = vector.load %arg1[%c0_10, %c2, %c0_11, %c0_12] : memref<1x4x16x16xf32, #tpu.memory_space<vmem>>, vector<1x1x16x16xf32>
    %9 = vector.shape_cast %8 : vector<1x1x16x16xf32> to vector<16x16xf32>
    %10 = arith.maximumf %6, %9 : vector<16x16xf32>
    %11 = arith.addf %7, %9 : vector<16x16xf32>
    %c0_13 = arith.constant 0 : index
    %c3 = arith.constant 3 : index
    %c0_14 = arith.constant 0 : index
    %c0_15 = arith.constant 0 : index
    %12 = vector.load %arg1[%c0_13, %c3, %c0_14, %c0_15] : memref<1x4x16x16xf32, #tpu.memory_space<vmem>>, vector<1x1x16x16xf32>
    %13 = vector.shape_cast %12 : vector<1x1x16x16xf32> to vector<16x16xf32>
    %14 = arith.maximumf %10, %13 : vector<16x16xf32>
    %15 = arith.addf %11, %13 : vector<16x16xf32>
    %c0_16 = arith.constant 0 : index
    %c0_17 = arith.constant 0 : index
    %16 = vector.load %arg2[%c0_16, %c0_17] : memref<22x16xf32, #tpu.memory_space<vmem>>, vector<22x16xf32>
    %cst = arith.constant dense<0.000000e+00> : vector<22x16xf32>
    %17 = tpu.matmul %16, %15, %cst {dimension_numbers = #tpu.dot_dimension_numbers<[1], [0], [0], [1], [0, 0, 1, 1], [], []>} : vector<22x16xf32>, vector<16x16xf32>, vector<22x16xf32> -> vector<22x16xf32>
    %cst_18 = arith.constant dense<0.000000e+00> : vector<22x16xf32>
    %18 = tpu.matmul %16, %14, %cst_18 {dimension_numbers = #tpu.dot_dimension_numbers<[1], [0], [0], [1], [0, 0, 1, 1], [], []>} : vector<22x16xf32>, vector<16x16xf32>, vector<22x16xf32> -> vector<22x16xf32>
    %c0_19 = arith.constant 0 : index
    %19 = memref.load %arg4[%c0_19] : memref<1xf32, #tpu.memory_space<smem>>
    %20 = vector.broadcast %19 : f32 to vector<16x16xf32>
    %cst_20 = arith.constant 0.000000e+00 : f32
    %21 = vector.broadcast %cst_20 : f32 to vector<16x16xf32>
    %22 = vector.extract_strided_slice %17 {offsets = [0, 0], sizes = [16, 16], strides = [1, 1]} : vector<22x16xf32> to vector<16x16xf32>
    %c0_21 = arith.constant 0 : index
    %c0_22 = arith.constant 0 : index
    %c0_23 = arith.constant 0 : index
    %c0_24 = arith.constant 0 : index
    %23 = vector.load %arg3[%c0_21, %c0_22, %c0_23, %c0_24] : memref<2x7x16x16xf32, #tpu.memory_space<vmem>>, vector<1x1x16x16xf32>
    %24 = vector.shape_cast %23 : vector<1x1x16x16xf32> to vector<16x16xf32>
    %cst_25 = arith.constant dense<0.000000e+00> : vector<16x16xf32>
    %25 = tpu.matmul %22, %24, %cst_25 {dimension_numbers = #tpu.dot_dimension_numbers<[1], [0], [0], [1], [0, 0, 1, 1], [], []>} : vector<16x16xf32>, vector<16x16xf32>, vector<16x16xf32> -> vector<16x16xf32>
    %26 = arith.addf %20, %25 : vector<16x16xf32>
    %27 = vector.extract_strided_slice %18 {offsets = [0, 0], sizes = [16, 16], strides = [1, 1]} : vector<22x16xf32> to vector<16x16xf32>
    %c1_26 = arith.constant 1 : index
    %c0_27 = arith.constant 0 : index
    %c0_28 = arith.constant 0 : index
    %c0_29 = arith.constant 0 : index
    %28 = vector.load %arg3[%c1_26, %c0_27, %c0_28, %c0_29] : memref<2x7x16x16xf32, #tpu.memory_space<vmem>>, vector<1x1x16x16xf32>
    %29 = vector.shape_cast %28 : vector<1x1x16x16xf32> to vector<16x16xf32>
    %cst_30 = arith.constant dense<0.000000e+00> : vector<16x16xf32>
    %30 = tpu.matmul %27, %29, %cst_30 {dimension_numbers = #tpu.dot_dimension_numbers<[1], [0], [0], [1], [0, 0, 1, 1], [], []>} : vector<16x16xf32>, vector<16x16xf32>, vector<16x16xf32> -> vector<16x16xf32>
    %31 = arith.addf %21, %30 : vector<16x16xf32>
    %32 = vector.extract_strided_slice %17 {offsets = [1, 0], sizes = [16, 16], strides = [1, 1]} : vector<22x16xf32> to vector<16x16xf32>
    %c0_31 = arith.constant 0 : index
    %c1_32 = arith.constant 1 : index
    %c0_33 = arith.constant 0 : index
    %c0_34 = arith.constant 0 : index
    %33 = vector.load %arg3[%c0_31, %c1_32, %c0_33, %c0_34] : memref<2x7x16x16xf32, #tpu.memory_space<vmem>>, vector<1x1x16x16xf32>
    %34 = vector.shape_cast %33 : vector<1x1x16x16xf32> to vector<16x16xf32>
    %cst_35 = arith.constant dense<0.000000e+00> : vector<16x16xf32>
    %35 = tpu.matmul %32, %34, %cst_35 {dimension_numbers = #tpu.dot_dimension_numbers<[1], [0], [0], [1], [0, 0, 1, 1], [], []>} : vector<16x16xf32>, vector<16x16xf32>, vector<16x16xf32> -> vector<16x16xf32>
    %36 = arith.addf %26, %35 : vector<16x16xf32>
    %37 = vector.extract_strided_slice %18 {offsets = [1, 0], sizes = [16, 16], strides = [1, 1]} : vector<22x16xf32> to vector<16x16xf32>
    %c1_36 = arith.constant 1 : index
    %c1_37 = arith.constant 1 : index
    %c0_38 = arith.constant 0 : index
    %c0_39 = arith.constant 0 : index
    %38 = vector.load %arg3[%c1_36, %c1_37, %c0_38, %c0_39] : memref<2x7x16x16xf32, #tpu.memory_space<vmem>>, vector<1x1x16x16xf32>
    %39 = vector.shape_cast %38 : vector<1x1x16x16xf32> to vector<16x16xf32>
    %cst_40 = arith.constant dense<0.000000e+00> : vector<16x16xf32>
    %40 = tpu.matmul %37, %39, %cst_40 {dimension_numbers = #tpu.dot_dimension_numbers<[1], [0], [0], [1], [0, 0, 1, 1], [], []>} : vector<16x16xf32>, vector<16x16xf32>, vector<16x16xf32> -> vector<16x16xf32>
    %41 = arith.addf %31, %40 : vector<16x16xf32>
    %42 = vector.extract_strided_slice %17 {offsets = [2, 0], sizes = [16, 16], strides = [1, 1]} : vector<22x16xf32> to vector<16x16xf32>
    %c0_41 = arith.constant 0 : index
    %c2_42 = arith.constant 2 : index
    %c0_43 = arith.constant 0 : index
    %c0_44 = arith.constant 0 : index
    %43 = vector.load %arg3[%c0_41, %c2_42, %c0_43, %c0_44] : memref<2x7x16x16xf32, #tpu.memory_space<vmem>>, vector<1x1x16x16xf32>
    %44 = vector.shape_cast %43 : vector<1x1x16x16xf32> to vector<16x16xf32>
    %cst_45 = arith.constant dense<0.000000e+00> : vector<16x16xf32>
    %45 = tpu.matmul %42, %44, %cst_45 {dimension_numbers = #tpu.dot_dimension_numbers<[1], [0], [0], [1], [0, 0, 1, 1], [], []>} : vector<16x16xf32>, vector<16x16xf32>, vector<16x16xf32> -> vector<16x16xf32>
    %46 = arith.addf %36, %45 : vector<16x16xf32>
    %47 = vector.extract_strided_slice %18 {offsets = [2, 0], sizes = [16, 16], strides = [1, 1]} : vector<22x16xf32> to vector<16x16xf32>
    %c1_46 = arith.constant 1 : index
    %c2_47 = arith.constant 2 : index
    %c0_48 = arith.constant 0 : index
    %c0_49 = arith.constant 0 : index
    %48 = vector.load %arg3[%c1_46, %c2_47, %c0_48, %c0_49] : memref<2x7x16x16xf32, #tpu.memory_space<vmem>>, vector<1x1x16x16xf32>
    %49 = vector.shape_cast %48 : vector<1x1x16x16xf32> to vector<16x16xf32>
    %cst_50 = arith.constant dense<0.000000e+00> : vector<16x16xf32>
    %50 = tpu.matmul %47, %49, %cst_50 {dimension_numbers = #tpu.dot_dimension_numbers<[1], [0], [0], [1], [0, 0, 1, 1], [], []>} : vector<16x16xf32>, vector<16x16xf32>, vector<16x16xf32> -> vector<16x16xf32>
    %51 = arith.addf %41, %50 : vector<16x16xf32>
    %52 = vector.extract_strided_slice %17 {offsets = [3, 0], sizes = [16, 16], strides = [1, 1]} : vector<22x16xf32> to vector<16x16xf32>
    %c0_51 = arith.constant 0 : index
    %c3_52 = arith.constant 3 : index
    %c0_53 = arith.constant 0 : index
    %c0_54 = arith.constant 0 : index
    %53 = vector.load %arg3[%c0_51, %c3_52, %c0_53, %c0_54] : memref<2x7x16x16xf32, #tpu.memory_space<vmem>>, vector<1x1x16x16xf32>
    %54 = vector.shape_cast %53 : vector<1x1x16x16xf32> to vector<16x16xf32>
    %cst_55 = arith.constant dense<0.000000e+00> : vector<16x16xf32>
    %55 = tpu.matmul %52, %54, %cst_55 {dimension_numbers = #tpu.dot_dimension_numbers<[1], [0], [0], [1], [0, 0, 1, 1], [], []>} : vector<16x16xf32>, vector<16x16xf32>, vector<16x16xf32> -> vector<16x16xf32>
    %56 = arith.addf %46, %55 : vector<16x16xf32>
    %57 = vector.extract_strided_slice %18 {offsets = [3, 0], sizes = [16, 16], strides = [1, 1]} : vector<22x16xf32> to vector<16x16xf32>
    %c1_56 = arith.constant 1 : index
    %c3_57 = arith.constant 3 : index
    %c0_58 = arith.constant 0 : index
    %c0_59 = arith.constant 0 : index
    %58 = vector.load %arg3[%c1_56, %c3_57, %c0_58, %c0_59] : memref<2x7x16x16xf32, #tpu.memory_space<vmem>>, vector<1x1x16x16xf32>
    %59 = vector.shape_cast %58 : vector<1x1x16x16xf32> to vector<16x16xf32>
    %cst_60 = arith.constant dense<0.000000e+00> : vector<16x16xf32>
    %60 = tpu.matmul %57, %59, %cst_60 {dimension_numbers = #tpu.dot_dimension_numbers<[1], [0], [0], [1], [0, 0, 1, 1], [], []>} : vector<16x16xf32>, vector<16x16xf32>, vector<16x16xf32> -> vector<16x16xf32>
    %61 = arith.addf %51, %60 : vector<16x16xf32>
    %62 = vector.extract_strided_slice %17 {offsets = [4, 0], sizes = [16, 16], strides = [1, 1]} : vector<22x16xf32> to vector<16x16xf32>
    %c0_61 = arith.constant 0 : index
    %c4 = arith.constant 4 : index
    %c0_62 = arith.constant 0 : index
    %c0_63 = arith.constant 0 : index
    %63 = vector.load %arg3[%c0_61, %c4, %c0_62, %c0_63] : memref<2x7x16x16xf32, #tpu.memory_space<vmem>>, vector<1x1x16x16xf32>
    %64 = vector.shape_cast %63 : vector<1x1x16x16xf32> to vector<16x16xf32>
    %cst_64 = arith.constant dense<0.000000e+00> : vector<16x16xf32>
    %65 = tpu.matmul %62, %64, %cst_64 {dimension_numbers = #tpu.dot_dimension_numbers<[1], [0], [0], [1], [0, 0, 1, 1], [], []>} : vector<16x16xf32>, vector<16x16xf32>, vector<16x16xf32> -> vector<16x16xf32>
    %66 = arith.addf %56, %65 : vector<16x16xf32>
    %67 = vector.extract_strided_slice %18 {offsets = [4, 0], sizes = [16, 16], strides = [1, 1]} : vector<22x16xf32> to vector<16x16xf32>
    %c1_65 = arith.constant 1 : index
    %c4_66 = arith.constant 4 : index
    %c0_67 = arith.constant 0 : index
    %c0_68 = arith.constant 0 : index
    %68 = vector.load %arg3[%c1_65, %c4_66, %c0_67, %c0_68] : memref<2x7x16x16xf32, #tpu.memory_space<vmem>>, vector<1x1x16x16xf32>
    %69 = vector.shape_cast %68 : vector<1x1x16x16xf32> to vector<16x16xf32>
    %cst_69 = arith.constant dense<0.000000e+00> : vector<16x16xf32>
    %70 = tpu.matmul %67, %69, %cst_69 {dimension_numbers = #tpu.dot_dimension_numbers<[1], [0], [0], [1], [0, 0, 1, 1], [], []>} : vector<16x16xf32>, vector<16x16xf32>, vector<16x16xf32> -> vector<16x16xf32>
    %71 = arith.addf %61, %70 : vector<16x16xf32>
    %72 = vector.extract_strided_slice %17 {offsets = [5, 0], sizes = [16, 16], strides = [1, 1]} : vector<22x16xf32> to vector<16x16xf32>
    %c0_70 = arith.constant 0 : index
    %c5 = arith.constant 5 : index
    %c0_71 = arith.constant 0 : index
    %c0_72 = arith.constant 0 : index
    %73 = vector.load %arg3[%c0_70, %c5, %c0_71, %c0_72] : memref<2x7x16x16xf32, #tpu.memory_space<vmem>>, vector<1x1x16x16xf32>
    %74 = vector.shape_cast %73 : vector<1x1x16x16xf32> to vector<16x16xf32>
    %cst_73 = arith.constant dense<0.000000e+00> : vector<16x16xf32>
    %75 = tpu.matmul %72, %74, %cst_73 {dimension_numbers = #tpu.dot_dimension_numbers<[1], [0], [0], [1], [0, 0, 1, 1], [], []>} : vector<16x16xf32>, vector<16x16xf32>, vector<16x16xf32> -> vector<16x16xf32>
    %76 = arith.addf %66, %75 : vector<16x16xf32>
    %77 = vector.extract_strided_slice %18 {offsets = [5, 0], sizes = [16, 16], strides = [1, 1]} : vector<22x16xf32> to vector<16x16xf32>
    %c1_74 = arith.constant 1 : index
    %c5_75 = arith.constant 5 : index
    %c0_76 = arith.constant 0 : index
    %c0_77 = arith.constant 0 : index
    %78 = vector.load %arg3[%c1_74, %c5_75, %c0_76, %c0_77] : memref<2x7x16x16xf32, #tpu.memory_space<vmem>>, vector<1x1x16x16xf32>
    %79 = vector.shape_cast %78 : vector<1x1x16x16xf32> to vector<16x16xf32>
    %cst_78 = arith.constant dense<0.000000e+00> : vector<16x16xf32>
    %80 = tpu.matmul %77, %79, %cst_78 {dimension_numbers = #tpu.dot_dimension_numbers<[1], [0], [0], [1], [0, 0, 1, 1], [], []>} : vector<16x16xf32>, vector<16x16xf32>, vector<16x16xf32> -> vector<16x16xf32>
    %81 = arith.addf %71, %80 : vector<16x16xf32>
    %82 = vector.extract_strided_slice %17 {offsets = [6, 0], sizes = [16, 16], strides = [1, 1]} : vector<22x16xf32> to vector<16x16xf32>
    %c0_79 = arith.constant 0 : index
    %c6 = arith.constant 6 : index
    %c0_80 = arith.constant 0 : index
    %c0_81 = arith.constant 0 : index
    %83 = vector.load %arg3[%c0_79, %c6, %c0_80, %c0_81] : memref<2x7x16x16xf32, #tpu.memory_space<vmem>>, vector<1x1x16x16xf32>
    %84 = vector.shape_cast %83 : vector<1x1x16x16xf32> to vector<16x16xf32>
    %cst_82 = arith.constant dense<0.000000e+00> : vector<16x16xf32>
    %85 = tpu.matmul %82, %84, %cst_82 {dimension_numbers = #tpu.dot_dimension_numbers<[1], [0], [0], [1], [0, 0, 1, 1], [], []>} : vector<16x16xf32>, vector<16x16xf32>, vector<16x16xf32> -> vector<16x16xf32>
    %86 = arith.addf %76, %85 : vector<16x16xf32>
    %87 = vector.extract_strided_slice %18 {offsets = [6, 0], sizes = [16, 16], strides = [1, 1]} : vector<22x16xf32> to vector<16x16xf32>
    %c1_83 = arith.constant 1 : index
    %c6_84 = arith.constant 6 : index
    %c0_85 = arith.constant 0 : index
    %c0_86 = arith.constant 0 : index
    %88 = vector.load %arg3[%c1_83, %c6_84, %c0_85, %c0_86] : memref<2x7x16x16xf32, #tpu.memory_space<vmem>>, vector<1x1x16x16xf32>
    %89 = vector.shape_cast %88 : vector<1x1x16x16xf32> to vector<16x16xf32>
    %cst_87 = arith.constant dense<0.000000e+00> : vector<16x16xf32>
    %90 = tpu.matmul %87, %89, %cst_87 {dimension_numbers = #tpu.dot_dimension_numbers<[1], [0], [0], [1], [0, 0, 1, 1], [], []>} : vector<16x16xf32>, vector<16x16xf32>, vector<16x16xf32> -> vector<16x16xf32>
    %91 = arith.addf %81, %90 : vector<16x16xf32>
    %92 = arith.addf %86, %91 : vector<16x16xf32>
    %c0_88 = arith.constant 0 : index
    %c0_89 = arith.constant 0 : index
    %c0_90 = arith.constant 0 : index
    %c0_91 = arith.constant 0 : index
    %93 = vector.load %arg5[%c0_88, %c0_89, %c0_90, %c0_91] : memref<1x1x16x16xf32, #tpu.memory_space<vmem>>, vector<1x1x16x16xf32>
    %94 = vector.shape_cast %93 : vector<1x1x16x16xf32> to vector<16x16xf32>
    %95 = vector.shape_cast %92 : vector<16x16xf32> to vector<1x1x16x16xf32>
    tpu.vector_store %arg5[%c0_88, %c0_89, %c0_90, %c0_91], %95 {strides = array<i32>} : memref<1x1x16x16xf32, #tpu.memory_space<vmem>>, vector<1x1x16x16xf32>,
    return
  }
  func.func @transform_0(%arg0: i32) -> (i32, i32, i32, i32) {
    %c0_i32 = arith.constant 0 : i32
    %c0_i32_0 = arith.constant 0 : i32
    %c0_i32_1 = arith.constant 0 : i32
    %c0_i32_2 = arith.constant 0 : i32
    return %arg0, %c0_i32, %c0_i32_0, %c0_i32_1 : i32, i32, i32, i32
  }
  func.func @transform_1(%arg0: i32) -> (i32, i32) {
    %c0_i32 = arith.constant 0 : i32
    %c0_i32_0 = arith.constant 0 : i32
    %c0_i32_1 = arith.constant 0 : i32
    return %c0_i32, %c0_i32_0 : i32, i32
  }
  func.func @transform_2(%arg0: i32) -> (i32, i32, i32, i32) {
    %c0_i32 = arith.constant 0 : i32
    %c0_i32_0 = arith.constant 0 : i32
    %c0_i32_1 = arith.constant 0 : i32
    %c0_i32_2 = arith.constant 0 : i32
    %c0_i32_3 = arith.constant 0 : i32
    return %c0_i32, %c0_i32_0, %c0_i32_1, %c0_i32_2 : i32, i32, i32, i32
  }
  func.func @transform_3(%arg0: i32) -> i32 {
    %c0_i32 = arith.constant 0 : i32
    %c0_i32_0 = arith.constant 0 : i32
    return %c0_i32 : i32
  }
  func.func @transform_4(%arg0: i32) -> (i32, i32, i32, i32) {
    %c0_i32 = arith.constant 0 : i32
    %c0_i32_0 = arith.constant 0 : i32
    %c0_i32_1 = arith.constant 0 : i32
    %c0_i32_2 = arith.constant 0 : i32
    return %arg0, %c0_i32, %c0_i32_0, %c0_i32_1 : i32, i32, i32, i32
  }
}

</mosaic_0001>

<llo_original>
// kernel: tpu_custom_call.1
$region0: #{tpu_custom_call.1}
  #allocation0 [shape = 'u32[]', space=smem, size = 0x4, offset = 0x4, fixed_abs, tag = 'smem constant byte address 0x4 - core index']
  #allocation1 [shape = 'u32[144,128]{1,0:T(1,128)}', space=vmem, size = 0x12000, scoped, tag = 'internal scratch']
  #allocation2 [shape = 'f32[1]{0:T(128)S(6)}', space=smem, size = 0x200, scoped, tag = 'scoped memory for tpu_custom_call.1']
  %s0 = inlined_call_operand.hbm [shape: f32[2,4,16,16], index: 0, kind: input, shape index: {}]
  %s1 = inlined_call_operand.vmem [shape: f32[22,16], index: 1, kind: input, shape index: {}]
  %s2 = inlined_call_operand.hbm [shape: f32[2,7,16,16], index: 2, kind: input, shape index: {}]
  %s3 = inlined_call_operand.<no memory space> [shape: f32[1], index: 3, kind: input, shape index: {}]
  %s4 = inlined_call_operand.hbm [shape: f32[2,1,16,16], index: 4, kind: output, shape index: {}]
  %s5 = sld [smem:[#allocation0]]
  $region57: #{tpu_custom_call.1} parent=0
    _
  %s7 = ssub.s32 1, %s5
  %s8 = scalar_select 0, %s7, %s5
  %9 = sst [smem:[#allocation2]] %s3
  $region1: #{tpu_custom_call.1} parent=0
    #allocation3 [shape = 'u8[65536]{0}', space=vmem, size = 0x10000, scoped, tag = 'input window, operand 0']
    #allocation4 [shape = 's32[2]{0}', space=sflag, size = 0x8, scoped, tag = 'scoped memory for tpu_custom_call.1']
    #allocation5 [shape = 's32[2]{0}', space=sflag, size = 0x8, scoped, tag = 'scoped memory for tpu_custom_call.1']
    #allocation6 [shape = 'u8[114688]{0}', space=vmem, size = 0x1c000, scoped, tag = 'input window, operand 2, single buffered']
    #allocation7 [shape = 's32[1]{0}', space=sflag, size = 0x4, scoped, tag = 'scoped memory for tpu_custom_call.1']
    #allocation8 [shape = 'u8[16384]{0}', space=vmem, size = 0x4000, scoped, tag = 'output window, operand 0']
    %10 = vsyncpa [#allocation4], 0
    %s11 = scalar_lea.sflag [#allocation4], 1
    %12 = vsyncpa %s11, 0
    %13 = vsyncpa [#allocation7], 0
    %14 = vsyncpa [#allocation5], 0
    %s15 = scalar_lea.sflag [#allocation5], 1
    %16 = vsyncpa %s15, 0
    loop: start=0, step=1, limit=4
    $region2: #{tpu_custom_call.1} parent=1 // loop_pre_header
      _
    $region3: #{tpu_custom_call.1} parent=1 // loop_header
      %s18 = sphi 0, %s22
      %p19 = scmp.ge.s32.totalorder %s18, 4
      %s28 = sphi 0, %s30
      %s31 = sphi 0, %s28
      %s32 = sphi 0, %s31
      %s48 = sphi 0, %s32
      %s52 = sphi 0, %s52
      %s54 = sphi 0, %s52
      %s55 = sphi 0, %s54
      %s69 = sphi 0, %s55
      %s73 = sphi 0, %s73
      %s75 = sphi 0, %s73
      %s76 = sphi 0, %s75
      %s90 = sphi 0, %s76
      %s94 = sphi 0, %s94
      %s96 = sphi 0, %s94
      %s97 = sphi 0, %s96
      %s111 = sphi 0, %s97
      %s117 = sphi 0, %s119
      %s120 = sphi 0, %s117
      %s121 = sphi 0, %s120
      %s137 = sphi 0, %s121
    $region4: #{tpu_custom_call.1} parent=1 // loop_header_branch
      %21 = sbr.rel (%p19) target = $region8
    $region5: #{tpu_custom_call.1} parent=1 // loop_body
      %s23 = ssub.s32 %s18, 1
      %s24 = ssub.s32 %s18, 2
      %s25 = sadd.s32 %s18, 1
      %s26 = ssub.s32 %s18, %s25
      %p27 = scmp.eq.s32.totalorder %s26, 0
      %s29 = sadd.s32 %s28, 1
      %s30 = scalar_select %p27, %s28, %s29
      %p33 = pneg %p27
      %p34 = scmp.eq.s32.totalorder %s18, 1
      %p35 = por %p33, %p34
      %p36 = scmp.ne.s32.totalorder %s28, %s31
      %p37 = scmp.eq.s32.totalorder %s18, 0
      %p38 = por %p36, %p37
      %p39 = scmp.ne.s32.totalorder %s28, %s31
      %p40 = scmp.eq.s32.totalorder %s23, 1
      %p41 = por %p39, %p40
      %p42 = scmp.ne.s32.totalorder %s31, %s32
      %p43 = scmp.eq.s32.totalorder %s23, 0
      %p44 = por %p42, %p43
      %p45 = scmp.ne.s32.totalorder %s31, %s32
      %p46 = scmp.eq.s32.totalorder %s24, 1
      %p47 = por %p45, %p46
      %p49 = scmp.ne.s32.totalorder %s32, %s48
      %p50 = scmp.eq.s32.totalorder %s24, 0
      %p51 = por %p49, %p50
      %s53 = sadd.s32 %s52, 1
      %p56 = scmp.eq.s32.totalorder %s18, 1
      %p57 = scmp.ne.s32.totalorder %s52, %s54
      %p58 = scmp.eq.s32.totalorder %s18, 0
      %p59 = por %p57, %p58
      %p60 = scmp.ne.s32.totalorder %s52, %s54
      %p61 = scmp.eq.s32.totalorder %s23, 1
      %p62 = por %p60, %p61
      %p63 = scmp.ne.s32.totalorder %s54, %s55
      %p64 = scmp.eq.s32.totalorder %s23, 0
      %p65 = por %p63, %p64
      %p66 = scmp.ne.s32.totalorder %s54, %s55
      %p67 = scmp.eq.s32.totalorder %s24, 1
      %p68 = por %p66, %p67
      %p70 = scmp.ne.s32.totalorder %s55, %s69
      %p71 = scmp.eq.s32.totalorder %s24, 0
      %p72 = por %p70, %p71
      %s74 = sadd.s32 %s73, 1
      %p77 = scmp.eq.s32.totalorder %s18, 1
      %p78 = scmp.ne.s32.totalorder %s73, %s75
      %p79 = scmp.eq.s32.totalorder %s18, 0
      %p80 = por %p78, %p79
      %p81 = scmp.ne.s32.totalorder %s73, %s75
      %p82 = scmp.eq.s32.totalorder %s23, 1
      %p83 = por %p81, %p82
      %p84 = scmp.ne.s32.totalorder %s75, %s76
      %p85 = scmp.eq.s32.totalorder %s23, 0
      %p86 = por %p84, %p85
      %p87 = scmp.ne.s32.totalorder %s75, %s76
      %p88 = scmp.eq.s32.totalorder %s24, 1
      %p89 = por %p87, %p88
      %p91 = scmp.ne.s32.totalorder %s76, %s90
      %p92 = scmp.eq.s32.totalorder %s24, 0
      %p93 = por %p91, %p92
      %s95 = sadd.s32 %s94, 1
      %p98 = scmp.eq.s32.totalorder %s18, 1
      %p99 = scmp.ne.s32.totalorder %s94, %s96
      %p100 = scmp.eq.s32.totalorder %s18, 0
      %p101 = por %p99, %p100
      %p102 = scmp.ne.s32.totalorder %s94, %s96
      %p103 = scmp.eq.s32.totalorder %s23, 1
      %p104 = por %p102, %p103
      %p105 = scmp.ne.s32.totalorder %s96, %s97
      %p106 = scmp.eq.s32.totalorder %s23, 0
      %p107 = por %p105, %p106
      %p108 = scmp.ne.s32.totalorder %s96, %s97
      %p109 = scmp.eq.s32.totalorder %s24, 1
      %p110 = por %p108, %p109
      %p112 = scmp.ne.s32.totalorder %s97, %s111
      %p113 = scmp.eq.s32.totalorder %s24, 0
      %p114 = por %p112, %p113
      %s115 = ssub.s32 %s18, %s25
      %p116 = scmp.eq.s32.totalorder %s115, 0
      %s118 = sadd.s32 %s117, 1
      %s119 = scalar_select %p116, %s117, %s118
      %p122 = pneg %p116
      %p123 = scmp.eq.s32.totalorder %s18, 1
      %p124 = por %p122, %p123
      %p125 = scmp.ne.s32.totalorder %s117, %s120
      %p126 = scmp.eq.s32.totalorder %s18, 0
      %p127 = por %p125, %p126
      %p128 = scmp.ne.s32.totalorder %s117, %s120
      %p129 = scmp.eq.s32.totalorder %s23, 1
      %p130 = por %p128, %p129
      %p131 = scmp.ne.s32.totalorder %s120, %s121
      %p132 = scmp.eq.s32.totalorder %s23, 0
      %p133 = por %p131, %p132
      %p134 = scmp.ne.s32.totalorder %s120, %s121
      %p135 = scmp.eq.s32.totalorder %s24, 1
      %p136 = por %p134, %p135
      %p138 = scmp.ne.s32.totalorder %s121, %s137
      %p139 = scmp.eq.s32.totalorder %s24, 0
      %p140 = por %p138, %p139
      %p141 = scmp.le.s32.totalorder 1, %s18
      %p142 = scmp.lt.s32.totalorder %s18, 3
      %p143 = pnand %p141, %p142
      %p144 = pneg %p143
      // Predicated region
      $region9: #{tpu_custom_call.1} parent=5 // pred_check
        _
      $region10: #{tpu_custom_call.1} parent=5 // pred_check_branch
        %146 = sbr.rel (%p143) target = $region12
      $region11: #{tpu_custom_call.1} parent=5 // pred_region
        %s147 = ssub.s32 %s18, 1
        // Predicated region
        $region13: #{tpu_custom_call.1} parent=11 // pred_check
          %p148 = pneg %p65
        $region14: #{tpu_custom_call.1} parent=11 // pred_check_branch
          %150 = sbr.rel (%p148) target = $region16
        $region15: #{tpu_custom_call.1} parent=11 // pred_region
          _
        $region16: #{tpu_custom_call.1} parent=11 // pred_fallthru
          _
        // Predicated region
        $region17: #{tpu_custom_call.1} parent=11 // pred_check
          %p151 = pneg %p86
        $region18: #{tpu_custom_call.1} parent=11 // pred_check_branch
          %153 = sbr.rel (%p151) target = $region20
        $region19: #{tpu_custom_call.1} parent=11 // pred_region
          %s155 = ssub.s32 3584, 3584
          %156 = vsyncadd [#allocation7], %s155
          %s157 = sshll.u32 [#allocation6], 4
          %s158 = int_to_ptr.vmem [resolvable:$true] %s157
          %163 = dma.hbm_to_vmem [thread:$0]  %s2, 3584, %s158, [#allocation7], 128, 128, 8
        $region20: #{tpu_custom_call.1} parent=11 // pred_fallthru
          _
        // Predicated region
        $region21: #{tpu_custom_call.1} parent=11 // pred_check
          %p164 = pneg %p107
        $region22: #{tpu_custom_call.1} parent=11 // pred_check_branch
          %166 = sbr.rel (%p164) target = $region24
        $region23: #{tpu_custom_call.1} parent=11 // pred_region
          _
        $region24: #{tpu_custom_call.1} parent=11 // pred_fallthru
          _
      $region12: #{tpu_custom_call.1} parent=5 // pred_fallthru
        _
      %p167 = scmp.lt.s32.totalorder %s18, 2
      // Predicated region
      $region25: #{tpu_custom_call.1} parent=5 // pred_check
        %p168 = pneg %p167
      $region26: #{tpu_custom_call.1} parent=5 // pred_check_branch
        %170 = sbr.rel (%p168) target = $region28
      $region27: #{tpu_custom_call.1} parent=5 // pred_region
        // Predicated region
        $region29: #{tpu_custom_call.1} parent=27 // pred_check
          %p171 = pneg %p38
        $region30: #{tpu_custom_call.1} parent=27 // pred_check_branch
          %173 = sbr.rel (%p171) target = $region32
        $region31: #{tpu_custom_call.1} parent=27 // pred_region
          %s174 = sand.u32 %s28, 1
          %s175 = scalar_lea.sflag [#allocation4], %s174
          %s176 = sand.u32 %s28, 1
          %s177 = smul.addr %s176, 64
          %s178 = scalar_lea.vmem [#allocation3], %s177
          %s180 = ssub.s32 1024, 1024
          %181 = vsyncadd %s175, %s180
          %s182 = smul.addr %s18, 8
          %s183 = smul.addr %s182, 128
          %s184 = scalar_lea.hbm %s0, %s183
          %s185 = sshll.u32 %s178, 4
          %s186 = int_to_ptr.vmem [resolvable:$true] %s185
          %191 = dma.hbm_to_vmem [thread:$0]  %s184, 1024, %s186, %s175, 128, 128, 8
        $region32: #{tpu_custom_call.1} parent=27 // pred_fallthru
          _
      $region28: #{tpu_custom_call.1} parent=5 // pred_fallthru
        _
      %p192 = scmp.le.s32.totalorder 1, %s18
      %p193 = scmp.lt.s32.totalorder %s18, 3
      %p194 = pnand %p192, %p193
      %p195 = pneg %p194
      // Predicated region
      $region33: #{tpu_custom_call.1} parent=5 // pred_check
        _
      $region34: #{tpu_custom_call.1} parent=5 // pred_check_branch
        %197 = sbr.rel (%p194) target = $region36
      $region35: #{tpu_custom_call.1} parent=5 // pred_region
        %s198 = ssub.s32 %s18, 1
        %s199 = sand.u32 %s31, 1
        %s200 = scalar_lea.sflag [#allocation4], %s199
        %s201 = sand.u32 %s31, 1
        %s202 = smul.addr %s201, 64
        %s203 = scalar_lea.vmem [#allocation3], %s202
        // Predicated region
        $region37: #{tpu_custom_call.1} parent=35 // pred_check
          %p204 = pneg %p44
        $region38: #{tpu_custom_call.1} parent=35 // pred_check_branch
          %206 = sbr.rel (%p204) target = $region40
        $region39: #{tpu_custom_call.1} parent=35 // pred_region
          %207 = dma.done %s200, 1024
        $region40: #{tpu_custom_call.1} parent=35 // pred_fallthru
          _
        // Predicated region
        $region41: #{tpu_custom_call.1} parent=35 // pred_check
          %p208 = pneg %p86
        $region42: #{tpu_custom_call.1} parent=35 // pred_check_branch
          %210 = sbr.rel (%p208) target = $region44
        $region43: #{tpu_custom_call.1} parent=35 // pred_region
          %211 = dma.done [#allocation7], 3584
        $region44: #{tpu_custom_call.1} parent=35 // pred_fallthru
          _
        %s212 = sand.u32 %s31, 1
        %s213 = scalar_lea.sflag [#allocation4], %s212
        %s214 = sand.u32 %s31, 1
        %s215 = smul.addr %s214, 64
        %s216 = scalar_lea.vmem [#allocation3], %s215
        %p217 = pneg %p44
        %p218 = pneg %p41
        %p219 = pneg %p65
        %p220 = pneg %p62
        %p221 = pneg %p86
        %p222 = pneg %p83
        %p223 = pneg %p107
        %p224 = pneg %p104
        %p225 = pneg %p133
        %p226 = pneg %p130
        %s227 = sand.u32 %s120, 1
        %s228 = scalar_lea.sflag [#allocation5], %s227
        %s229 = sand.u32 %s120, 1
        %s230 = smul.addr %s229, 16
        %s231 = scalar_lea.vmem [#allocation8], %s230
        %v232 = vld [vmem:[%s203] sm:$0xff]
        %v233 = vld [vmem:[%s203 + $0x8] sm:$0xff]
        %s234 = scalar_lea.vmem %s203, 16 [#allocation3]
        %v235 = vld [vmem:[%s234] sm:$0xff]
        %v236 = vld [vmem:[%s234 + $0x8] sm:$0xff]
        %v237 = vmax.f32 %v232, %v235
        %v238 = vmax.f32 %v233, %v236
        %v239 = vadd.f32 %v232, %v235
        %v240 = vadd.f32 %v233, %v236
        %s241 = scalar_lea.vmem %s203, 32 [#allocation3]
        %v242 = vld [vmem:[%s241] sm:$0xff]
        %v243 = vld [vmem:[%s241 + $0x8] sm:$0xff]
        %v244 = vmax.f32 %v237, %v242
        %v245 = vmax.f32 %v238, %v243
        %v246 = vadd.f32 %v239, %v242
        %v247 = vadd.f32 %v240, %v243
        %s248 = scalar_lea.vmem %s203, 48 [#allocation3]
        %v249 = vld [vmem:[%s248] sm:$0xff]
        %v250 = vld [vmem:[%s248 + $0x8] sm:$0xff]
        %v251 = vmax.f32 %v244, %v249
        %v252 = vmax.f32 %v245, %v250
        %v253 = vadd.f32 %v246, %v249
        %v254 = vadd.f32 %v247, %v250
        %v255 = vld [vmem:[%s1] sm:$0xff]
        %v256 = vld [vmem:[%s1 + $0x8] sm:$0xff]
        %v257 = vld [vmem:[%s1 + $0x10] sm:$0x3f]
        %vm258 = vcmask 130048
        %v260 = vsel %vm258, %v255, 0
        %v263 = vsel %vm258, %v256, 0
        %v266 = vsel %vm258, %v257, 0
        %268 = vmatprep.subr.mxu0 0.0
        %269 = vmatpush1.msra.mxu0 0.0
        %270 = vmatprep.subr.mxu0 0.0
        %271 = vmatpush1.msra.mxu0 0.0
        %272 = vmatprep.subr.mxu0 0.0
        %273 = vmatpush1.msra.mxu0 0.0
        %274 = vmatprep.subr.mxu0 0.0
        %275 = vmatpush1.msra.mxu0 0.0
        %276 = vmatprep.subr.mxu0 0.0
        %277 = vmatpush1.msra.mxu0 0.0
        %278 = vmatprep.subr.mxu0 0.0
        %279 = vmatpush1.msra.mxu0 0.0
        %280 = vmatprep.subr.mxu0 0.0
        %281 = vmatpush1.msra.mxu0 0.0
        %282 = vmatprep.subr.mxu0 0.0
        %283 = vmatpush1.msra.mxu0 0.0
        %284 = vmatprep.subr.mxu0 0.0
        %285 = vmatpush1.msra.mxu0 0.0
        %286 = vmatprep.subr.mxu0 0.0
        %287 = vmatpush1.msra.mxu0 0.0
        %288 = vmatprep.subr.mxu0 0.0
        %289 = vmatpush1.msra.mxu0 0.0
        %290 = vmatprep.subr.mxu0 0.0
        %291 = vmatpush1.msra.mxu0 0.0
        %292 = vmatprep.subr.mxu0 0.0
        %293 = vmatpush1.msra.mxu0 0.0
        %294 = vmatprep.subr.mxu0 0.0
        %295 = vmatpush1.msra.mxu0 0.0
        %296 = vmatprep.subr.mxu0 0.0
        %297 = vmatpush1.msra.mxu0 %v254
        %298 = vmatprep.subr.mxu0 0.0
        %299 = vmatpush1.msra.mxu0 %v253
        %300 = vmatprep.subr.mxu0 0.0
        %301 = vmatpush2.msra.mxu0 0.0
        %302 = vmatprep.subr.mxu0 0.0
        %303 = vmatpush2.msra.mxu0 0.0
        %304 = vmatprep.subr.mxu0 0.0
        %305 = vmatpush2.msra.mxu0 0.0
        %306 = vmatprep.subr.mxu0 0.0
        %307 = vmatpush2.msra.mxu0 0.0
        %308 = vmatprep.subr.mxu0 0.0
        %309 = vmatpush2.msra.mxu0 0.0
        %310 = vmatprep.subr.mxu0 0.0
        %311 = vmatpush2.msra.mxu0 0.0
        %312 = vmatprep.subr.mxu0 0.0
        %313 = vmatpush2.msra.mxu0 0.0
        %314 = vmatprep.subr.mxu0 0.0
        %315 = vmatpush2.msra.mxu0 0.0
        %316 = vmatprep.subr.mxu0 0.0
        %317 = vmatpush2.msra.mxu0 0.0
        %318 = vmatprep.subr.mxu0 0.0
        %319 = vmatpush2.msra.mxu0 0.0
        %320 = vmatprep.subr.mxu0 0.0
        %321 = vmatpush2.msra.mxu0 0.0
        %322 = vmatprep.subr.mxu0 0.0
        %323 = vmatpush2.msra.mxu0 0.0
        %324 = vmatprep.subr.mxu0 0.0
        %325 = vmatpush2.msra.mxu0 0.0
        %326 = vmatprep.subr.mxu0 0.0
        %327 = vmatpush2.msra.mxu0 0.0
        %328 = vmatprep.subr.mxu0 0.0
        %329 = vmatpush2.msra.mxu0 0.0
        %330 = vmatprep.subr.mxu0 0.0
        %331 = vmatpush2.msra.mxu0 0.0
        %332 = vmatprep.mubr.f32.mxu0 0.0
        %333 = vmatmul.mubr.f32.gmra.mxu0 %v260
        %v334 = vpop.f32.mrf.mxu0
        %v335 = vadd.f32 0.0, %v334
        %v336 = vpop.f32.mrf.mxu0
        %337 = vmatprep.mubr.f32.mxu0 0.0
        %338 = vmatmul.mubr.f32.gmra.mxu0 %v263
        %v339 = vpop.f32.mrf.mxu0
        %v340 = vadd.f32 0.0, %v339
        %v341 = vpop.f32.mrf.mxu0
        %342 = vmatprep.mubr.f32.mxu0 0.0
        %343 = vmatmul.mubr.f32.gmra.mxu0 %v266
        %v344 = vpop.f32.mrf.mxu0
        %v345 = vadd.f32 0.0, %v344
        %v346 = vpop.f32.mrf.mxu0
        %347 = vdwg.mxu0
        %348 = vmatprep.subr.mxu0 0.0
        %349 = vmatpush1.msra.mxu0 0.0
        %350 = vmatprep.subr.mxu0 0.0
        %351 = vmatpush1.msra.mxu0 0.0
        %352 = vmatprep.subr.mxu0 0.0
        %353 = vmatpush1.msra.mxu0 0.0
        %354 = vmatprep.subr.mxu0 0.0
        %355 = vmatpush1.msra.mxu0 0.0
        %356 = vmatprep.subr.mxu0 0.0
        %357 = vmatpush1.msra.mxu0 0.0
        %358 = vmatprep.subr.mxu0 0.0
        %359 = vmatpush1.msra.mxu0 0.0
        %360 = vmatprep.subr.mxu0 0.0
        %361 = vmatpush1.msra.mxu0 0.0
        %362 = vmatprep.subr.mxu0 0.0
        %363 = vmatpush1.msra.mxu0 0.0
        %364 = vmatprep.subr.mxu0 0.0
        %365 = vmatpush1.msra.mxu0 0.0
        %366 = vmatprep.subr.mxu0 0.0
        %367 = vmatpush1.msra.mxu0 0.0
        %368 = vmatprep.subr.mxu0 0.0
        %369 = vmatpush1.msra.mxu0 0.0
        %370 = vmatprep.subr.mxu0 0.0
        %371 = vmatpush1.msra.mxu0 0.0
        %372 = vmatprep.subr.mxu0 0.0
        %373 = vmatpush1.msra.mxu0 0.0
        %374 = vmatprep.subr.mxu0 0.0
        %375 = vmatpush1.msra.mxu0 0.0
        %376 = vmatprep.subr.mxu0 0.0
        %377 = vmatpush1.msra.mxu0 %v252
        %378 = vmatprep.subr.mxu0 0.0
        %379 = vmatpush1.msra.mxu0 %v251
        %380 = vmatprep.subr.mxu0 0.0
        %381 = vmatpush2.msra.mxu0 0.0
        %382 = vmatprep.subr.mxu0 0.0
        %383 = vmatpush2.msra.mxu0 0.0
        %384 = vmatprep.subr.mxu0 0.0
        %385 = vmatpush2.msra.mxu0 0.0
        %386 = vmatprep.subr.mxu0 0.0
        %387 = vmatpush2.msra.mxu0 0.0
        %388 = vmatprep.subr.mxu0 0.0
        %389 = vmatpush2.msra.mxu0 0.0
        %390 = vmatprep.subr.mxu0 0.0
        %391 = vmatpush2.msra.mxu0 0.0
        %392 = vmatprep.subr.mxu0 0.0
        %393 = vmatpush2.msra.mxu0 0.0
        %394 = vmatprep.subr.mxu0 0.0
        %395 = vmatpush2.msra.mxu0 0.0
        %396 = vmatprep.subr.mxu0 0.0
        %397 = vmatpush2.msra.mxu0 0.0
        %398 = vmatprep.subr.mxu0 0.0
        %399 = vmatpush2.msra.mxu0 0.0
        %400 = vmatprep.subr.mxu0 0.0
        %401 = vmatpush2.msra.mxu0 0.0
        %402 = vmatprep.subr.mxu0 0.0
        %403 = vmatpush2.msra.mxu0 0.0
        %404 = vmatprep.subr.mxu0 0.0
        %405 = vmatpush2.msra.mxu0 0.0
        %406 = vmatprep.subr.mxu0 0.0
        %407 = vmatpush2.msra.mxu0 0.0
        %408 = vmatprep.subr.mxu0 0.0
        %409 = vmatpush2.msra.mxu0 0.0
        %410 = vmatprep.subr.mxu0 0.0
        %411 = vmatpush2.msra.mxu0 0.0
        %412 = vmatprep.mubr.f32.mxu0 0.0
        %413 = vmatmul.mubr.f32.gmra.mxu0 %v260
        %v414 = vpop.f32.mrf.mxu0
        %v415 = vadd.f32 0.0, %v414
        %v416 = vpop.f32.mrf.mxu0
        %417 = vmatprep.mubr.f32.mxu0 0.0
        %418 = vmatmul.mubr.f32.gmra.mxu0 %v263
        %v419 = vpop.f32.mrf.mxu0
        %v420 = vadd.f32 0.0, %v419
        %v421 = vpop.f32.mrf.mxu0
        %422 = vmatprep.mubr.f32.mxu0 0.0
        %423 = vmatmul.mubr.f32.gmra.mxu0 %v266
        %v424 = vpop.f32.mrf.mxu0
        %v425 = vadd.f32 0.0, %v424
        %v426 = vpop.f32.mrf.mxu0
        %427 = vdwg.mxu0
        %s428 = sld [smem:[#allocation2]]
        %v429 = vstv %s428
        %v430 = vld [vmem:[#allocation6] sm:$0xff]
        %v431 = vld [vmem:[#allocation6 + $0x8] sm:$0xff]
        %v433 = vsel %vm258, %v335, 0
        %v436 = vsel %vm258, %v340, 0
        %438 = vmatprep.subr.mxu0 0.0
        %439 = vmatpush1.msra.mxu0 0.0
        %440 = vmatprep.subr.mxu0 0.0
        %441 = vmatpush1.msra.mxu0 0.0
        %442 = vmatprep.subr.mxu0 0.0
        %443 = vmatpush1.msra.mxu0 0.0
        %444 = vmatprep.subr.mxu0 0.0
        %445 = vmatpush1.msra.mxu0 0.0
        %446 = vmatprep.subr.mxu0 0.0
        %447 = vmatpush1.msra.mxu0 0.0
        %448 = vmatprep.subr.mxu0 0.0
        %449 = vmatpush1.msra.mxu0 0.0
        %450 = vmatprep.subr.mxu0 0.0
        %451 = vmatpush1.msra.mxu0 0.0
        %452 = vmatprep.subr.mxu0 0.0
        %453 = vmatpush1.msra.mxu0 0.0
        %454 = vmatprep.subr.mxu0 0.0
        %455 = vmatpush1.msra.mxu0 0.0
        %456 = vmatprep.subr.mxu0 0.0
        %457 = vmatpush1.msra.mxu0 0.0
        %458 = vmatprep.subr.mxu0 0.0
        %459 = vmatpush1.msra.mxu0 0.0
        %460 = vmatprep.subr.mxu0 0.0
        %461 = vmatpush1.msra.mxu0 0.0
        %462 = vmatprep.subr.mxu0 0.0
        %463 = vmatpush1.msra.mxu0 0.0
        %464 = vmatprep.subr.mxu0 0.0
        %465 = vmatpush1.msra.mxu0 0.0
        %466 = vmatprep.subr.mxu0 0.0
        %467 = vmatpush1.msra.mxu0 %v431
        %468 = vmatprep.subr.mxu0 0.0
        %469 = vmatpush1.msra.mxu0 %v430
        %470 = vmatprep.subr.mxu0 0.0
        %471 = vmatpush2.msra.mxu0 0.0
        %472 = vmatprep.subr.mxu0 0.0
        %473 = vmatpush2.msra.mxu0 0.0
        %474 = vmatprep.subr.mxu0 0.0
        %475 = vmatpush2.msra.mxu0 0.0
        %476 = vmatprep.subr.mxu0 0.0
        %477 = vmatpush2.msra.mxu0 0.0
        %478 = vmatprep.subr.mxu0 0.0
        %479 = vmatpush2.msra.mxu0 0.0
        %480 = vmatprep.subr.mxu0 0.0
        %481 = vmatpush2.msra.mxu0 0.0
        %482 = vmatprep.subr.mxu0 0.0
        %483 = vmatpush2.msra.mxu0 0.0
        %484 = vmatprep.subr.mxu0 0.0
        %485 = vmatpush2.msra.mxu0 0.0
        %486 = vmatprep.subr.mxu0 0.0
        %487 = vmatpush2.msra.mxu0 0.0
        %488 = vmatprep.subr.mxu0 0.0
        %489 = vmatpush2.msra.mxu0 0.0
        %490 = vmatprep.subr.mxu0 0.0
        %491 = vmatpush2.msra.mxu0 0.0
        %492 = vmatprep.subr.mxu0 0.0
        %493 = vmatpush2.msra.mxu0 0.0
        %494 = vmatprep.subr.mxu0 0.0
        %495 = vmatpush2.msra.mxu0 0.0
        %496 = vmatprep.subr.mxu0 0.0
        %497 = vmatpush2.msra.mxu0 0.0
        %498 = vmatprep.subr.mxu0 0.0
        %499 = vmatpush2.msra.mxu0 0.0
        %500 = vmatprep.subr.mxu0 0.0
        %501 = vmatpush2.msra.mxu0 0.0
        %502 = vmatprep.mubr.f32.mxu0 0.0
        %503 = vmatmul.mubr.f32.gmra.mxu0 %v433
        %v504 = vpop.f32.mrf.mxu0
        %v505 = vadd.f32 0.0, %v504
        %v506 = vpop.f32.mrf.mxu0
        %507 = vmatprep.mubr.f32.mxu0 0.0
        %508 = vmatmul.mubr.f32.gmra.mxu0 %v436
        %v509 = vpop.f32.mrf.mxu0
        %v510 = vadd.f32 0.0, %v509
        %v511 = vpop.f32.mrf.mxu0
        %512 = vdwg.mxu0
        %v513 = vadd.f32 %v429, %v505
        %v514 = vadd.f32 %v429, %v510
        %s515 = scalar_lea.vmem [#allocation6], 112
        %v516 = vld [vmem:[%s515] sm:$0xff]
        %v517 = vld [vmem:[%s515 + $0x8] sm:$0xff]
        %s518 = scalar_lea.vmem [#allocation6], 16
        %v519 = vld [vmem:[%s518] sm:$0xff]
        %v520 = vld [vmem:[%s518 + $0x8] sm:$0xff]
        %vm522 = vcmask 1046528
        %v523 = vrot.slane %v335, 1
        %v524 = vrot.slane %v340, 1
        %v525 = vsel %vm522, %v523, %v524
        %v526 = vrot.slane %v345, 1
        %v527 = vsel %vm522, %v524, %v526
        %v528 = vsel %vm258, %v525, 0
        %v530 = vsel %vm258, %v527, 0
        %532 = vmatprep.subr.mxu0 0.0
        %533 = vmatpush1.msra.mxu0 0.0
        %534 = vmatprep.subr.mxu0 0.0
        %535 = vmatpush1.msra.mxu0 0.0
        %536 = vmatprep.subr.mxu0 0.0
        %537 = vmatpush1.msra.mxu0 0.0
        %538 = vmatprep.subr.mxu0 0.0
        %539 = vmatpush1.msra.mxu0 0.0
        %540 = vmatprep.subr.mxu0 0.0
        %541 = vmatpush1.msra.mxu0 0.0
        %542 = vmatprep.subr.mxu0 0.0
        %543 = vmatpush1.msra.mxu0 0.0
        %544 = vmatprep.subr.mxu0 0.0
        %545 = vmatpush1.msra.mxu0 0.0
        %546 = vmatprep.subr.mxu0 0.0
        %547 = vmatpush1.msra.mxu0 0.0
        %548 = vmatprep.subr.mxu0 0.0
        %549 = vmatpush1.msra.mxu0 0.0
        %550 = vmatprep.subr.mxu0 0.0
        %551 = vmatpush1.msra.mxu0 0.0
        %552 = vmatprep.subr.mxu0 0.0
        %553 = vmatpush1.msra.mxu0 0.0
        %554 = vmatprep.subr.mxu0 0.0
        %555 = vmatpush1.msra.mxu0 0.0
        %556 = vmatprep.subr.mxu0 0.0
        %557 = vmatpush1.msra.mxu0 0.0
        %558 = vmatprep.subr.mxu0 0.0
        %559 = vmatpush1.msra.mxu0 0.0
        %560 = vmatprep.subr.mxu0 0.0
        %561 = vmatpush1.msra.mxu0 %v520
        %562 = vmatprep.subr.mxu0 0.0
        %563 = vmatpush1.msra.mxu0 %v519
        %564 = vmatprep.subr.mxu0 0.0
        %565 = vmatpush2.msra.mxu0 0.0
        %566 = vmatprep.subr.mxu0 0.0
        %567 = vmatpush2.msra.mxu0 0.0
        %568 = vmatprep.subr.mxu0 0.0
        %569 = vmatpush2.msra.mxu0 0.0
        %570 = vmatprep.subr.mxu0 0.0
        %571 = vmatpush2.msra.mxu0 0.0
        %572 = vmatprep.subr.mxu0 0.0
        %573 = vmatpush2.msra.mxu0 0.0
        %574 = vmatprep.subr.mxu0 0.0
        %575 = vmatpush2.msra.mxu0 0.0
        %576 = vmatprep.subr.mxu0 0.0
        %577 = vmatpush2.msra.mxu0 0.0
        %578 = vmatprep.subr.mxu0 0.0
        %579 = vmatpush2.msra.mxu0 0.0
        %580 = vmatprep.subr.mxu0 0.0
        %581 = vmatpush2.msra.mxu0 0.0
        %582 = vmatprep.subr.mxu0 0.0
        %583 = vmatpush2.msra.mxu0 0.0
        %584 = vmatprep.subr.mxu0 0.0
        %585 = vmatpush2.msra.mxu0 0.0
        %586 = vmatprep.subr.mxu0 0.0
        %587 = vmatpush2.msra.mxu0 0.0
        %588 = vmatprep.subr.mxu0 0.0
        %589 = vmatpush2.msra.mxu0 0.0
        %590 = vmatprep.subr.mxu0 0.0
        %591 = vmatpush2.msra.mxu0 0.0
        %592 = vmatprep.subr.mxu0 0.0
        %593 = vmatpush2.msra.mxu0 0.0
        %594 = vmatprep.subr.mxu0 0.0
        %595 = vmatpush2.msra.mxu0 0.0
        %596 = vmatprep.mubr.f32.mxu0 0.0
        %597 = vmatmul.mubr.f32.gmra.mxu0 %v528
        %v598 = vpop.f32.mrf.mxu0
        %v599 = vadd.f32 0.0, %v598
        %v600 = vpop.f32.mrf.mxu0
        %601 = vmatprep.mubr.f32.mxu0 0.0
        %602 = vmatmul.mubr.f32.gmra.mxu0 %v530
        %v603 = vpop.f32.mrf.mxu0
        %v604 = vadd.f32 0.0, %v603
        %v605 = vpop.f32.mrf.mxu0
        %606 = vdwg.mxu0
        %v607 = vadd.f32 %v513, %v599
        %v608 = vadd.f32 %v514, %v604
        %s609 = scalar_lea.vmem [#allocation6], 128
        %v610 = vld [vmem:[%s609] sm:$0xff]
        %v611 = vld [vmem:[%s609 + $0x8] sm:$0xff]
        %v615 = vrot.slane %v415, 1
        %v616 = vrot.slane %v420, 1
        %v617 = vsel %vm522, %v615, %v616
        %v618 = vrot.slane %v425, 1
        %v619 = vsel %vm522, %v616, %v618
        %v620 = vsel %vm258, %v617, 0
        %v622 = vsel %vm258, %v619, 0
        %624 = vmatprep.subr.mxu0 0.0
        %625 = vmatpush1.msra.mxu0 0.0
        %626 = vmatprep.subr.mxu0 0.0
        %627 = vmatpush1.msra.mxu0 0.0
        %628 = vmatprep.subr.mxu0 0.0
        %629 = vmatpush1.msra.mxu0 0.0
        %630 = vmatprep.subr.mxu0 0.0
        %631 = vmatpush1.msra.mxu0 0.0
        %632 = vmatprep.subr.mxu0 0.0
        %633 = vmatpush1.msra.mxu0 0.0
        %634 = vmatprep.subr.mxu0 0.0
        %635 = vmatpush1.msra.mxu0 0.0
        %636 = vmatprep.subr.mxu0 0.0
        %637 = vmatpush1.msra.mxu0 0.0
        %638 = vmatprep.subr.mxu0 0.0
        %639 = vmatpush1.msra.mxu0 0.0
        %640 = vmatprep.subr.mxu0 0.0
        %641 = vmatpush1.msra.mxu0 0.0
        %642 = vmatprep.subr.mxu0 0.0
        %643 = vmatpush1.msra.mxu0 0.0
        %644 = vmatprep.subr.mxu0 0.0
        %645 = vmatpush1.msra.mxu0 0.0
        %646 = vmatprep.subr.mxu0 0.0
        %647 = vmatpush1.msra.mxu0 0.0
        %648 = vmatprep.subr.mxu0 0.0
        %649 = vmatpush1.msra.mxu0 0.0
        %650 = vmatprep.subr.mxu0 0.0
        %651 = vmatpush1.msra.mxu0 0.0
        %652 = vmatprep.subr.mxu0 0.0
        %653 = vmatpush1.msra.mxu0 %v611
        %654 = vmatprep.subr.mxu0 0.0
        %655 = vmatpush1.msra.mxu0 %v610
        %656 = vmatprep.subr.mxu0 0.0
        %657 = vmatpush2.msra.mxu0 0.0
        %658 = vmatprep.subr.mxu0 0.0
        %659 = vmatpush2.msra.mxu0 0.0
        %660 = vmatprep.subr.mxu0 0.0
        %661 = vmatpush2.msra.mxu0 0.0
        %662 = vmatprep.subr.mxu0 0.0
        %663 = vmatpush2.msra.mxu0 0.0
        %664 = vmatprep.subr.mxu0 0.0
        %665 = vmatpush2.msra.mxu0 0.0
        %666 = vmatprep.subr.mxu0 0.0
        %667 = vmatpush2.msra.mxu0 0.0
        %668 = vmatprep.subr.mxu0 0.0
        %669 = vmatpush2.msra.mxu0 0.0
        %670 = vmatprep.subr.mxu0 0.0
        %671 = vmatpush2.msra.mxu0 0.0
        %672 = vmatprep.subr.mxu0 0.0
        %673 = vmatpush2.msra.mxu0 0.0
        %674 = vmatprep.subr.mxu0 0.0
        %675 = vmatpush2.msra.mxu0 0.0
        %676 = vmatprep.subr.mxu0 0.0
        %677 = vmatpush2.msra.mxu0 0.0
        %678 = vmatprep.subr.mxu0 0.0
        %679 = vmatpush2.msra.mxu0 0.0
        %680 = vmatprep.subr.mxu0 0.0
        %681 = vmatpush2.msra.mxu0 0.0
        %682 = vmatprep.subr.mxu0 0.0
        %683 = vmatpush2.msra.mxu0 0.0
        %684 = vmatprep.subr.mxu0 0.0
        %685 = vmatpush2.msra.mxu0 0.0
        %686 = vmatprep.subr.mxu0 0.0
        %687 = vmatpush2.msra.mxu0 0.0
        %688 = vmatprep.mubr.f32.mxu0 0.0
        %689 = vmatmul.mubr.f32.gmra.mxu0 %v620
        %v690 = vpop.f32.mrf.mxu0
        %v691 = vadd.f32 0.0, %v690
        %v692 = vpop.f32.mrf.mxu0
        %693 = vmatprep.mubr.f32.mxu0 0.0
        %694 = vmatmul.mubr.f32.gmra.mxu0 %v622
        %v695 = vpop.f32.mrf.mxu0
        %v696 = vadd.f32 0.0, %v695
        %v697 = vpop.f32.mrf.mxu0
        %698 = vdwg.mxu0
        %v699 = vsel %vm258, %v415, 0
        %v701 = vsel %vm258, %v420, 0
        %703 = vmatprep.subr.mxu0 0.0
        %704 = vmatpush1.msra.mxu0 0.0
        %705 = vmatprep.subr.mxu0 0.0
        %706 = vmatpush1.msra.mxu0 0.0
        %707 = vmatprep.subr.mxu0 0.0
        %708 = vmatpush1.msra.mxu0 0.0
        %709 = vmatprep.subr.mxu0 0.0
        %710 = vmatpush1.msra.mxu0 0.0
        %711 = vmatprep.subr.mxu0 0.0
        %712 = vmatpush1.msra.mxu0 0.0
        %713 = vmatprep.subr.mxu0 0.0
        %714 = vmatpush1.msra.mxu0 0.0
        %715 = vmatprep.subr.mxu0 0.0
        %716 = vmatpush1.msra.mxu0 0.0
        %717 = vmatprep.subr.mxu0 0.0
        %718 = vmatpush1.msra.mxu0 0.0
        %719 = vmatprep.subr.mxu0 0.0
        %720 = vmatpush1.msra.mxu0 0.0
        %721 = vmatprep.subr.mxu0 0.0
        %722 = vmatpush1.msra.mxu0 0.0
        %723 = vmatprep.subr.mxu0 0.0
        %724 = vmatpush1.msra.mxu0 0.0
        %725 = vmatprep.subr.mxu0 0.0
        %726 = vmatpush1.msra.mxu0 0.0
        %727 = vmatprep.subr.mxu0 0.0
        %728 = vmatpush1.msra.mxu0 0.0
        %729 = vmatprep.subr.mxu0 0.0
        %730 = vmatpush1.msra.mxu0 0.0
        %731 = vmatprep.subr.mxu0 0.0
        %732 = vmatpush1.msra.mxu0 %v517
        %733 = vmatprep.subr.mxu0 0.0
        %734 = vmatpush1.msra.mxu0 %v516
        %735 = vmatprep.subr.mxu0 0.0
        %736 = vmatpush2.msra.mxu0 0.0
        %737 = vmatprep.subr.mxu0 0.0
        %738 = vmatpush2.msra.mxu0 0.0
        %739 = vmatprep.subr.mxu0 0.0
        %740 = vmatpush2.msra.mxu0 0.0
        %741 = vmatprep.subr.mxu0 0.0
        %742 = vmatpush2.msra.mxu0 0.0
        %743 = vmatprep.subr.mxu0 0.0
        %744 = vmatpush2.msra.mxu0 0.0
        %745 = vmatprep.subr.mxu0 0.0
        %746 = vmatpush2.msra.mxu0 0.0
        %747 = vmatprep.subr.mxu0 0.0
        %748 = vmatpush2.msra.mxu0 0.0
        %749 = vmatprep.subr.mxu0 0.0
        %750 = vmatpush2.msra.mxu0 0.0
        %751 = vmatprep.subr.mxu0 0.0
        %752 = vmatpush2.msra.mxu0 0.0
        %753 = vmatprep.subr.mxu0 0.0
        %754 = vmatpush2.msra.mxu0 0.0
        %755 = vmatprep.subr.mxu0 0.0
        %756 = vmatpush2.msra.mxu0 0.0
        %757 = vmatprep.subr.mxu0 0.0
        %758 = vmatpush2.msra.mxu0 0.0
        %759 = vmatprep.subr.mxu0 0.0
        %760 = vmatpush2.msra.mxu0 0.0
        %761 = vmatprep.subr.mxu0 0.0
        %762 = vmatpush2.msra.mxu0 0.0
        %763 = vmatprep.subr.mxu0 0.0
        %764 = vmatpush2.msra.mxu0 0.0
        %765 = vmatprep.subr.mxu0 0.0
        %766 = vmatpush2.msra.mxu0 0.0
        %767 = vmatprep.mubr.f32.mxu0 0.0
        %768 = vmatmul.mubr.f32.gmra.mxu0 %v699
        %v769 = vpop.f32.mrf.mxu0
        %v770 = vadd.f32 %v691, %v769
        %v771 = vpop.f32.mrf.mxu0
        %772 = vmatprep.mubr.f32.mxu0 0.0
        %773 = vmatmul.mubr.f32.gmra.mxu0 %v701
        %v774 = vpop.f32.mrf.mxu0
        %v775 = vadd.f32 %v696, %v774
        %v776 = vpop.f32.mrf.mxu0
        %777 = vdwg.mxu0
        %s778 = scalar_lea.vmem [#allocation6], 32
        %v779 = vld [vmem:[%s778] sm:$0xff]
        %v780 = vld [vmem:[%s778 + $0x8] sm:$0xff]
        %vm781 = vcmask 1045504
        %v782 = vrot.slane %v335, 2
        %v783 = vrot.slane %v340, 2
        %v784 = vsel %vm781, %v782, %v783
        %v785 = vrot.slane %v345, 2
        %v786 = vsel %vm781, %v783, %v785
        %v787 = vsel %vm258, %v784, 0
        %v789 = vsel %vm258, %v786, 0
        %791 = vmatprep.subr.mxu0 0.0
        %792 = vmatpush1.msra.mxu0 0.0
        %793 = vmatprep.subr.mxu0 0.0
        %794 = vmatpush1.msra.mxu0 0.0
        %795 = vmatprep.subr.mxu0 0.0
        %796 = vmatpush1.msra.mxu0 0.0
        %797 = vmatprep.subr.mxu0 0.0
        %798 = vmatpush1.msra.mxu0 0.0
        %799 = vmatprep.subr.mxu0 0.0
        %800 = vmatpush1.msra.mxu0 0.0
        %801 = vmatprep.subr.mxu0 0.0
        %802 = vmatpush1.msra.mxu0 0.0
        %803 = vmatprep.subr.mxu0 0.0
        %804 = vmatpush1.msra.mxu0 0.0
        %805 = vmatprep.subr.mxu0 0.0
        %806 = vmatpush1.msra.mxu0 0.0
        %807 = vmatprep.subr.mxu0 0.0
        %808 = vmatpush1.msra.mxu0 0.0
        %809 = vmatprep.subr.mxu0 0.0
        %810 = vmatpush1.msra.mxu0 0.0
        %811 = vmatprep.subr.mxu0 0.0
        %812 = vmatpush1.msra.mxu0 0.0
        %813 = vmatprep.subr.mxu0 0.0
        %814 = vmatpush1.msra.mxu0 0.0
        %815 = vmatprep.subr.mxu0 0.0
        %816 = vmatpush1.msra.mxu0 0.0
        %817 = vmatprep.subr.mxu0 0.0
        %818 = vmatpush1.msra.mxu0 0.0
        %819 = vmatprep.subr.mxu0 0.0
        %820 = vmatpush1.msra.mxu0 %v780
        %821 = vmatprep.subr.mxu0 0.0
        %822 = vmatpush1.msra.mxu0 %v779
        %823 = vmatprep.subr.mxu0 0.0
        %824 = vmatpush2.msra.mxu0 0.0
        %825 = vmatprep.subr.mxu0 0.0
        %826 = vmatpush2.msra.mxu0 0.0
        %827 = vmatprep.subr.mxu0 0.0
        %828 = vmatpush2.msra.mxu0 0.0
        %829 = vmatprep.subr.mxu0 0.0
        %830 = vmatpush2.msra.mxu0 0.0
        %831 = vmatprep.subr.mxu0 0.0
        %832 = vmatpush2.msra.mxu0 0.0
        %833 = vmatprep.subr.mxu0 0.0
        %834 = vmatpush2.msra.mxu0 0.0
        %835 = vmatprep.subr.mxu0 0.0
        %836 = vmatpush2.msra.mxu0 0.0
        %837 = vmatprep.subr.mxu0 0.0
        %838 = vmatpush2.msra.mxu0 0.0
        %839 = vmatprep.subr.mxu0 0.0
        %840 = vmatpush2.msra.mxu0 0.0
        %841 = vmatprep.subr.mxu0 0.0
        %842 = vmatpush2.msra.mxu0 0.0
        %843 = vmatprep.subr.mxu0 0.0
        %844 = vmatpush2.msra.mxu0 0.0
        %845 = vmatprep.subr.mxu0 0.0
        %846 = vmatpush2.msra.mxu0 0.0
        %847 = vmatprep.subr.mxu0 0.0
        %848 = vmatpush2.msra.mxu0 0.0
        %849 = vmatprep.subr.mxu0 0.0
        %850 = vmatpush2.msra.mxu0 0.0
        %851 = vmatprep.subr.mxu0 0.0
        %852 = vmatpush2.msra.mxu0 0.0
        %853 = vmatprep.subr.mxu0 0.0
        %854 = vmatpush2.msra.mxu0 0.0
        %855 = vmatprep.mubr.f32.mxu0 0.0
        %856 = vmatmul.mubr.f32.gmra.mxu0 %v787
        %v857 = vpop.f32.mrf.mxu0
        %v858 = vadd.f32 0.0, %v857
        %v859 = vpop.f32.mrf.mxu0
        %860 = vmatprep.mubr.f32.mxu0 0.0
        %861 = vmatmul.mubr.f32.gmra.mxu0 %v789
        %v862 = vpop.f32.mrf.mxu0
        %v863 = vadd.f32 0.0, %v862
        %v864 = vpop.f32.mrf.mxu0
        %865 = vdwg.mxu0
        %v866 = vadd.f32 %v607, %v858
        %v867 = vadd.f32 %v608, %v863
        %s868 = scalar_lea.vmem [#allocation6], 144
        %v869 = vld [vmem:[%s868] sm:$0xff]
        %v870 = vld [vmem:[%s868 + $0x8] sm:$0xff]
        %v871 = vrot.slane %v415, 2
        %v872 = vrot.slane %v420, 2
        %v873 = vsel %vm781, %v871, %v872
        %v874 = vrot.slane %v425, 2
        %v875 = vsel %vm781, %v872, %v874
        %v876 = vsel %vm258, %v873, 0
        %v878 = vsel %vm258, %v875, 0
        %880 = vmatprep.subr.mxu0 0.0
        %881 = vmatpush1.msra.mxu0 0.0
        %882 = vmatprep.subr.mxu0 0.0
        %883 = vmatpush1.msra.mxu0 0.0
        %884 = vmatprep.subr.mxu0 0.0
        %885 = vmatpush1.msra.mxu0 0.0
        %886 = vmatprep.subr.mxu0 0.0
        %887 = vmatpush1.msra.mxu0 0.0
        %888 = vmatprep.subr.mxu0 0.0
        %889 = vmatpush1.msra.mxu0 0.0
        %890 = vmatprep.subr.mxu0 0.0
        %891 = vmatpush1.msra.mxu0 0.0
        %892 = vmatprep.subr.mxu0 0.0
        %893 = vmatpush1.msra.mxu0 0.0
        %894 = vmatprep.subr.mxu0 0.0
        %895 = vmatpush1.msra.mxu0 0.0
        %896 = vmatprep.subr.mxu0 0.0
        %897 = vmatpush1.msra.mxu0 0.0
        %898 = vmatprep.subr.mxu0 0.0
        %899 = vmatpush1.msra.mxu0 0.0
        %900 = vmatprep.subr.mxu0 0.0
        %901 = vmatpush1.msra.mxu0 0.0
        %902 = vmatprep.subr.mxu0 0.0
        %903 = vmatpush1.msra.mxu0 0.0
        %904 = vmatprep.subr.mxu0 0.0
        %905 = vmatpush1.msra.mxu0 0.0
        %906 = vmatprep.subr.mxu0 0.0
        %907 = vmatpush1.msra.mxu0 0.0
        %908 = vmatprep.subr.mxu0 0.0
        %909 = vmatpush1.msra.mxu0 %v870
        %910 = vmatprep.subr.mxu0 0.0
        %911 = vmatpush1.msra.mxu0 %v869
        %912 = vmatprep.subr.mxu0 0.0
        %913 = vmatpush2.msra.mxu0 0.0
        %914 = vmatprep.subr.mxu0 0.0
        %915 = vmatpush2.msra.mxu0 0.0
        %916 = vmatprep.subr.mxu0 0.0
        %917 = vmatpush2.msra.mxu0 0.0
        %918 = vmatprep.subr.mxu0 0.0
        %919 = vmatpush2.msra.mxu0 0.0
        %920 = vmatprep.subr.mxu0 0.0
        %921 = vmatpush2.msra.mxu0 0.0
        %922 = vmatprep.subr.mxu0 0.0
        %923 = vmatpush2.msra.mxu0 0.0
        %924 = vmatprep.subr.mxu0 0.0
        %925 = vmatpush2.msra.mxu0 0.0
        %926 = vmatprep.subr.mxu0 0.0
        %927 = vmatpush2.msra.mxu0 0.0
        %928 = vmatprep.subr.mxu0 0.0
        %929 = vmatpush2.msra.mxu0 0.0
        %930 = vmatprep.subr.mxu0 0.0
        %931 = vmatpush2.msra.mxu0 0.0
        %932 = vmatprep.subr.mxu0 0.0
        %933 = vmatpush2.msra.mxu0 0.0
        %934 = vmatprep.subr.mxu0 0.0
        %935 = vmatpush2.msra.mxu0 0.0
        %936 = vmatprep.subr.mxu0 0.0
        %937 = vmatpush2.msra.mxu0 0.0
        %938 = vmatprep.subr.mxu0 0.0
        %939 = vmatpush2.msra.mxu0 0.0
        %940 = vmatprep.subr.mxu0 0.0
        %941 = vmatpush2.msra.mxu0 0.0
        %942 = vmatprep.subr.mxu0 0.0
        %943 = vmatpush2.msra.mxu0 0.0
        %944 = vmatprep.mubr.f32.mxu0 0.0
        %945 = vmatmul.mubr.f32.gmra.mxu0 %v876
        %v946 = vpop.f32.mrf.mxu0
        %v947 = vadd.f32 0.0, %v946
        %v948 = vpop.f32.mrf.mxu0
        %949 = vmatprep.mubr.f32.mxu0 0.0
        %950 = vmatmul.mubr.f32.gmra.mxu0 %v878
        %v951 = vpop.f32.mrf.mxu0
        %v952 = vadd.f32 0.0, %v951
        %v953 = vpop.f32.mrf.mxu0
        %954 = vdwg.mxu0
        %v955 = vadd.f32 %v770, %v947
        %v956 = vadd.f32 %v775, %v952
        %s957 = scalar_lea.vmem [#allocation6], 48
        %v958 = vld [vmem:[%s957] sm:$0xff]
        %v959 = vld [vmem:[%s957 + $0x8] sm:$0xff]
        %vm960 = vcmask 1044480
        %v961 = vrot.slane %v335, 3
        %v962 = vrot.slane %v340, 3
        %v963 = vsel %vm960, %v961, %v962
        %v964 = vrot.slane %v345, 3
        %v965 = vsel %vm960, %v962, %v964
        %v966 = vsel %vm258, %v963, 0
        %v968 = vsel %vm258, %v965, 0
        %970 = vmatprep.subr.mxu0 0.0
        %971 = vmatpush1.msra.mxu0 0.0
        %972 = vmatprep.subr.mxu0 0.0
        %973 = vmatpush1.msra.mxu0 0.0
        %974 = vmatprep.subr.mxu0 0.0
        %975 = vmatpush1.msra.mxu0 0.0
        %976 = vmatprep.subr.mxu0 0.0
        %977 = vmatpush1.msra.mxu0 0.0
        %978 = vmatprep.subr.mxu0 0.0
        %979 = vmatpush1.msra.mxu0 0.0
        %980 = vmatprep.subr.mxu0 0.0
        %981 = vmatpush1.msra.mxu0 0.0
        %982 = vmatprep.subr.mxu0 0.0
        %983 = vmatpush1.msra.mxu0 0.0
        %984 = vmatprep.subr.mxu0 0.0
        %985 = vmatpush1.msra.mxu0 0.0
        %986 = vmatprep.subr.mxu0 0.0
        %987 = vmatpush1.msra.mxu0 0.0
        %988 = vmatprep.subr.mxu0 0.0
        %989 = vmatpush1.msra.mxu0 0.0
        %990 = vmatprep.subr.mxu0 0.0
        %991 = vmatpush1.msra.mxu0 0.0
        %992 = vmatprep.subr.mxu0 0.0
        %993 = vmatpush1.msra.mxu0 0.0
        %994 = vmatprep.subr.mxu0 0.0
        %995 = vmatpush1.msra.mxu0 0.0
        %996 = vmatprep.subr.mxu0 0.0
        %997 = vmatpush1.msra.mxu0 0.0
        %998 = vmatprep.subr.mxu0 0.0
        %999 = vmatpush1.msra.mxu0 %v959
        %1000 = vmatprep.subr.mxu0 0.0
        %1001 = vmatpush1.msra.mxu0 %v958
        %1002 = vmatprep.subr.mxu0 0.0
        %1003 = vmatpush2.msra.mxu0 0.0
        %1004 = vmatprep.subr.mxu0 0.0
        %1005 = vmatpush2.msra.mxu0 0.0
        %1006 = vmatprep.subr.mxu0 0.0
        %1007 = vmatpush2.msra.mxu0 0.0
        %1008 = vmatprep.subr.mxu0 0.0
        %1009 = vmatpush2.msra.mxu0 0.0
        %1010 = vmatprep.subr.mxu0 0.0
        %1011 = vmatpush2.msra.mxu0 0.0
        %1012 = vmatprep.subr.mxu0 0.0
        %1013 = vmatpush2.msra.mxu0 0.0
        %1014 = vmatprep.subr.mxu0 0.0
        %1015 = vmatpush2.msra.mxu0 0.0
        %1016 = vmatprep.subr.mxu0 0.0
        %1017 = vmatpush2.msra.mxu0 0.0
        %1018 = vmatprep.subr.mxu0 0.0
        %1019 = vmatpush2.msra.mxu0 0.0
        %1020 = vmatprep.subr.mxu0 0.0
        %1021 = vmatpush2.msra.mxu0 0.0
        %1022 = vmatprep.subr.mxu0 0.0
        %1023 = vmatpush2.msra.mxu0 0.0
        %1024 = vmatprep.subr.mxu0 0.0
        %1025 = vmatpush2.msra.mxu0 0.0
        %1026 = vmatprep.subr.mxu0 0.0
        %1027 = vmatpush2.msra.mxu0 0.0
        %1028 = vmatprep.subr.mxu0 0.0
        %1029 = vmatpush2.msra.mxu0 0.0
        %1030 = vmatprep.subr.mxu0 0.0
        %1031 = vmatpush2.msra.mxu0 0.0
        %1032 = vmatprep.subr.mxu0 0.0
        %1033 = vmatpush2.msra.mxu0 0.0
        %1034 = vmatprep.mubr.f32.mxu0 0.0
        %1035 = vmatmul.mubr.f32.gmra.mxu0 %v966
        %v1036 = vpop.f32.mrf.mxu0
        %v1037 = vadd.f32 0.0, %v1036
        %v1038 = vpop.f32.mrf.mxu0
        %1039 = vmatprep.mubr.f32.mxu0 0.0
        %1040 = vmatmul.mubr.f32.gmra.mxu0 %v968
        %v1041 = vpop.f32.mrf.mxu0
        %v1042 = vadd.f32 0.0, %v1041
        %v1043 = vpop.f32.mrf.mxu0
        %1044 = vdwg.mxu0
        %v1045 = vadd.f32 %v866, %v1037
        %v1046 = vadd.f32 %v867, %v1042
        %s1047 = scalar_lea.vmem [#allocation6], 160
        %v1048 = vld [vmem:[%s1047] sm:$0xff]
        %v1049 = vld [vmem:[%s1047 + $0x8] sm:$0xff]
        %v1050 = vrot.slane %v415, 3
        %v1051 = vrot.slane %v420, 3
        %v1052 = vsel %vm960, %v1050, %v1051
        %v1053 = vrot.slane %v425, 3
        %v1054 = vsel %vm960, %v1051, %v1053
        %v1055 = vsel %vm258, %v1052, 0
        %v1057 = vsel %vm258, %v1054, 0
        %1059 = vmatprep.subr.mxu0 0.0
        %1060 = vmatpush1.msra.mxu0 0.0
        %1061 = vmatprep.subr.mxu0 0.0
        %1062 = vmatpush1.msra.mxu0 0.0
        %1063 = vmatprep.subr.mxu0 0.0
        %1064 = vmatpush1.msra.mxu0 0.0
        %1065 = vmatprep.subr.mxu0 0.0
        %1066 = vmatpush1.msra.mxu0 0.0
        %1067 = vmatprep.subr.mxu0 0.0
        %1068 = vmatpush1.msra.mxu0 0.0
        %1069 = vmatprep.subr.mxu0 0.0
        %1070 = vmatpush1.msra.mxu0 0.0
        %1071 = vmatprep.subr.mxu0 0.0
        %1072 = vmatpush1.msra.mxu0 0.0
        %1073 = vmatprep.subr.mxu0 0.0
        %1074 = vmatpush1.msra.mxu0 0.0
        %1075 = vmatprep.subr.mxu0 0.0
        %1076 = vmatpush1.msra.mxu0 0.0
        %1077 = vmatprep.subr.mxu0 0.0
        %1078 = vmatpush1.msra.mxu0 0.0
        %1079 = vmatprep.subr.mxu0 0.0
        %1080 = vmatpush1.msra.mxu0 0.0
        %1081 = vmatprep.subr.mxu0 0.0
        %1082 = vmatpush1.msra.mxu0 0.0
        %1083 = vmatprep.subr.mxu0 0.0
        %1084 = vmatpush1.msra.mxu0 0.0
        %1085 = vmatprep.subr.mxu0 0.0
        %1086 = vmatpush1.msra.mxu0 0.0
        %1087 = vmatprep.subr.mxu0 0.0
        %1088 = vmatpush1.msra.mxu0 %v1049
        %1089 = vmatprep.subr.mxu0 0.0
        %1090 = vmatpush1.msra.mxu0 %v1048
        %1091 = vmatprep.subr.mxu0 0.0
        %1092 = vmatpush2.msra.mxu0 0.0
        %1093 = vmatprep.subr.mxu0 0.0
        %1094 = vmatpush2.msra.mxu0 0.0
        %1095 = vmatprep.subr.mxu0 0.0
        %1096 = vmatpush2.msra.mxu0 0.0
        %1097 = vmatprep.subr.mxu0 0.0
        %1098 = vmatpush2.msra.mxu0 0.0
        %1099 = vmatprep.subr.mxu0 0.0
        %1100 = vmatpush2.msra.mxu0 0.0
        %1101 = vmatprep.subr.mxu0 0.0
        %1102 = vmatpush2.msra.mxu0 0.0
        %1103 = vmatprep.subr.mxu0 0.0
        %1104 = vmatpush2.msra.mxu0 0.0
        %1105 = vmatprep.subr.mxu0 0.0
        %1106 = vmatpush2.msra.mxu0 0.0
        %1107 = vmatprep.subr.mxu0 0.0
        %1108 = vmatpush2.msra.mxu0 0.0
        %1109 = vmatprep.subr.mxu0 0.0
        %1110 = vmatpush2.msra.mxu0 0.0
        %1111 = vmatprep.subr.mxu0 0.0
        %1112 = vmatpush2.msra.mxu0 0.0
        %1113 = vmatprep.subr.mxu0 0.0
        %1114 = vmatpush2.msra.mxu0 0.0
        %1115 = vmatprep.subr.mxu0 0.0
        %1116 = vmatpush2.msra.mxu0 0.0
        %1117 = vmatprep.subr.mxu0 0.0
        %1118 = vmatpush2.msra.mxu0 0.0
        %1119 = vmatprep.subr.mxu0 0.0
        %1120 = vmatpush2.msra.mxu0 0.0
        %1121 = vmatprep.subr.mxu0 0.0
        %1122 = vmatpush2.msra.mxu0 0.0
        %1123 = vmatprep.mubr.f32.mxu0 0.0
        %1124 = vmatmul.mubr.f32.gmra.mxu0 %v1055
        %v1125 = vpop.f32.mrf.mxu0
        %v1126 = vadd.f32 0.0, %v1125
        %v1127 = vpop.f32.mrf.mxu0
        %1128 = vmatprep.mubr.f32.mxu0 0.0
        %1129 = vmatmul.mubr.f32.gmra.mxu0 %v1057
        %v1130 = vpop.f32.mrf.mxu0
        %v1131 = vadd.f32 0.0, %v1130
        %v1132 = vpop.f32.mrf.mxu0
        %1133 = vdwg.mxu0
        %v1134 = vadd.f32 %v955, %v1126
        %v1135 = vadd.f32 %v956, %v1131
        %s1136 = scalar_lea.vmem [#allocation6], 64
        %v1137 = vld [vmem:[%s1136] sm:$0xff]
        %v1138 = vld [vmem:[%s1136 + $0x8] sm:$0xff]
        %vm1139 = vcmask 1043456
        %v1140 = vrot.slane %v335, 4
        %v1141 = vrot.slane %v340, 4
        %v1142 = vsel %vm1139, %v1140, %v1141
        %v1143 = vrot.slane %v345, 4
        %v1144 = vsel %vm1139, %v1141, %v1143
        %v1145 = vsel %vm258, %v1142, 0
        %v1147 = vsel %vm258, %v1144, 0
        %1149 = vmatprep.subr.mxu0 0.0
        %1150 = vmatpush1.msra.mxu0 0.0
        %1151 = vmatprep.subr.mxu0 0.0
        %1152 = vmatpush1.msra.mxu0 0.0
        %1153 = vmatprep.subr.mxu0 0.0
        %1154 = vmatpush1.msra.mxu0 0.0
        %1155 = vmatprep.subr.mxu0 0.0
        %1156 = vmatpush1.msra.mxu0 0.0
        %1157 = vmatprep.subr.mxu0 0.0
        %1158 = vmatpush1.msra.mxu0 0.0
        %1159 = vmatprep.subr.mxu0 0.0
        %1160 = vmatpush1.msra.mxu0 0.0
        %1161 = vmatprep.subr.mxu0 0.0
        %1162 = vmatpush1.msra.mxu0 0.0
        %1163 = vmatprep.subr.mxu0 0.0
        %1164 = vmatpush1.msra.mxu0 0.0
        %1165 = vmatprep.subr.mxu0 0.0
        %1166 = vmatpush1.msra.mxu0 0.0
        %1167 = vmatprep.subr.mxu0 0.0
        %1168 = vmatpush1.msra.mxu0 0.0
        %1169 = vmatprep.subr.mxu0 0.0
        %1170 = vmatpush1.msra.mxu0 0.0
        %1171 = vmatprep.subr.mxu0 0.0
        %1172 = vmatpush1.msra.mxu0 0.0
        %1173 = vmatprep.subr.mxu0 0.0
        %1174 = vmatpush1.msra.mxu0 0.0
        %1175 = vmatprep.subr.mxu0 0.0
        %1176 = vmatpush1.msra.mxu0 0.0
        %1177 = vmatprep.subr.mxu0 0.0
        %1178 = vmatpush1.msra.mxu0 %v1138
        %1179 = vmatprep.subr.mxu0 0.0
        %1180 = vmatpush1.msra.mxu0 %v1137
        %1181 = vmatprep.subr.mxu0 0.0
        %1182 = vmatpush2.msra.mxu0 0.0
        %1183 = vmatprep.subr.mxu0 0.0
        %1184 = vmatpush2.msra.mxu0 0.0
        %1185 = vmatprep.subr.mxu0 0.0
        %1186 = vmatpush2.msra.mxu0 0.0
        %1187 = vmatprep.subr.mxu0 0.0
        %1188 = vmatpush2.msra.mxu0 0.0
        %1189 = vmatprep.subr.mxu0 0.0
        %1190 = vmatpush2.msra.mxu0 0.0
        %1191 = vmatprep.subr.mxu0 0.0
        %1192 = vmatpush2.msra.mxu0 0.0
        %1193 = vmatprep.subr.mxu0 0.0
        %1194 = vmatpush2.msra.mxu0 0.0
        %1195 = vmatprep.subr.mxu0 0.0
        %1196 = vmatpush2.msra.mxu0 0.0
        %1197 = vmatprep.subr.mxu0 0.0
        %1198 = vmatpush2.msra.mxu0 0.0
        %1199 = vmatprep.subr.mxu0 0.0
        %1200 = vmatpush2.msra.mxu0 0.0
        %1201 = vmatprep.subr.mxu0 0.0
        %1202 = vmatpush2.msra.mxu0 0.0
        %1203 = vmatprep.subr.mxu0 0.0
        %1204 = vmatpush2.msra.mxu0 0.0
        %1205 = vmatprep.subr.mxu0 0.0
        %1206 = vmatpush2.msra.mxu0 0.0
        %1207 = vmatprep.subr.mxu0 0.0
        %1208 = vmatpush2.msra.mxu0 0.0
        %1209 = vmatprep.subr.mxu0 0.0
        %1210 = vmatpush2.msra.mxu0 0.0
        %1211 = vmatprep.subr.mxu0 0.0
        %1212 = vmatpush2.msra.mxu0 0.0
        %1213 = vmatprep.mubr.f32.mxu0 0.0
        %1214 = vmatmul.mubr.f32.gmra.mxu0 %v1145
        %v1215 = vpop.f32.mrf.mxu0
        %v1216 = vadd.f32 0.0, %v1215
        %v1217 = vpop.f32.mrf.mxu0
        %1218 = vmatprep.mubr.f32.mxu0 0.0
        %1219 = vmatmul.mubr.f32.gmra.mxu0 %v1147
        %v1220 = vpop.f32.mrf.mxu0
        %v1221 = vadd.f32 0.0, %v1220
        %v1222 = vpop.f32.mrf.mxu0
        %1223 = vdwg.mxu0
        %v1224 = vadd.f32 %v1045, %v1216
        %v1225 = vadd.f32 %v1046, %v1221
        %s1226 = scalar_lea.vmem [#allocation6], 176
        %v1227 = vld [vmem:[%s1226] sm:$0xff]
        %v1228 = vld [vmem:[%s1226 + $0x8] sm:$0xff]
        %v1229 = vrot.slane %v415, 4
        %v1230 = vrot.slane %v420, 4
        %v1231 = vsel %vm1139, %v1229, %v1230
        %v1232 = vrot.slane %v425, 4
        %v1233 = vsel %vm1139, %v1230, %v1232
        %v1234 = vsel %vm258, %v1231, 0
        %v1236 = vsel %vm258, %v1233, 0
        %1238 = vmatprep.subr.mxu0 0.0
        %1239 = vmatpush1.msra.mxu0 0.0
        %1240 = vmatprep.subr.mxu0 0.0
        %1241 = vmatpush1.msra.mxu0 0.0
        %1242 = vmatprep.subr.mxu0 0.0
        %1243 = vmatpush1.msra.mxu0 0.0
        %1244 = vmatprep.subr.mxu0 0.0
        %1245 = vmatpush1.msra.mxu0 0.0
        %1246 = vmatprep.subr.mxu0 0.0
        %1247 = vmatpush1.msra.mxu0 0.0
        %1248 = vmatprep.subr.mxu0 0.0
        %1249 = vmatpush1.msra.mxu0 0.0
        %1250 = vmatprep.subr.mxu0 0.0
        %1251 = vmatpush1.msra.mxu0 0.0
        %1252 = vmatprep.subr.mxu0 0.0
        %1253 = vmatpush1.msra.mxu0 0.0
        %1254 = vmatprep.subr.mxu0 0.0
        %1255 = vmatpush1.msra.mxu0 0.0
        %1256 = vmatprep.subr.mxu0 0.0
        %1257 = vmatpush1.msra.mxu0 0.0
        %1258 = vmatprep.subr.mxu0 0.0
        %1259 = vmatpush1.msra.mxu0 0.0
        %1260 = vmatprep.subr.mxu0 0.0
        %1261 = vmatpush1.msra.mxu0 0.0
        %1262 = vmatprep.subr.mxu0 0.0
        %1263 = vmatpush1.msra.mxu0 0.0
        %1264 = vmatprep.subr.mxu0 0.0
        %1265 = vmatpush1.msra.mxu0 0.0
        %1266 = vmatprep.subr.mxu0 0.0
        %1267 = vmatpush1.msra.mxu0 %v1228
        %1268 = vmatprep.subr.mxu0 0.0
        %1269 = vmatpush1.msra.mxu0 %v1227
        %1270 = vmatprep.subr.mxu0 0.0
        %1271 = vmatpush2.msra.mxu0 0.0
        %1272 = vmatprep.subr.mxu0 0.0
        %1273 = vmatpush2.msra.mxu0 0.0
        %1274 = vmatprep.subr.mxu0 0.0
        %1275 = vmatpush2.msra.mxu0 0.0
        %1276 = vmatprep.subr.mxu0 0.0
        %1277 = vmatpush2.msra.mxu0 0.0
        %1278 = vmatprep.subr.mxu0 0.0
        %1279 = vmatpush2.msra.mxu0 0.0
        %1280 = vmatprep.subr.mxu0 0.0
        %1281 = vmatpush2.msra.mxu0 0.0
        %1282 = vmatprep.subr.mxu0 0.0
        %1283 = vmatpush2.msra.mxu0 0.0
        %1284 = vmatprep.subr.mxu0 0.0
        %1285 = vmatpush2.msra.mxu0 0.0
        %1286 = vmatprep.subr.mxu0 0.0
        %1287 = vmatpush2.msra.mxu0 0.0
        %1288 = vmatprep.subr.mxu0 0.0
        %1289 = vmatpush2.msra.mxu0 0.0
        %1290 = vmatprep.subr.mxu0 0.0
        %1291 = vmatpush2.msra.mxu0 0.0
        %1292 = vmatprep.subr.mxu0 0.0
        %1293 = vmatpush2.msra.mxu0 0.0
        %1294 = vmatprep.subr.mxu0 0.0
        %1295 = vmatpush2.msra.mxu0 0.0
        %1296 = vmatprep.subr.mxu0 0.0
        %1297 = vmatpush2.msra.mxu0 0.0
        %1298 = vmatprep.subr.mxu0 0.0
        %1299 = vmatpush2.msra.mxu0 0.0
        %1300 = vmatprep.subr.mxu0 0.0
        %1301 = vmatpush2.msra.mxu0 0.0
        %1302 = vmatprep.mubr.f32.mxu0 0.0
        %1303 = vmatmul.mubr.f32.gmra.mxu0 %v1234
        %v1304 = vpop.f32.mrf.mxu0
        %v1305 = vadd.f32 0.0, %v1304
        %v1306 = vpop.f32.mrf.mxu0
        %1307 = vmatprep.mubr.f32.mxu0 0.0
        %1308 = vmatmul.mubr.f32.gmra.mxu0 %v1236
        %v1309 = vpop.f32.mrf.mxu0
        %v1310 = vadd.f32 0.0, %v1309
        %v1311 = vpop.f32.mrf.mxu0
        %1312 = vdwg.mxu0
        %v1313 = vadd.f32 %v1134, %v1305
        %v1314 = vadd.f32 %v1135, %v1310
        %s1315 = scalar_lea.vmem [#allocation6], 80
        %v1316 = vld [vmem:[%s1315] sm:$0xff]
        %v1317 = vld [vmem:[%s1315 + $0x8] sm:$0xff]
        %vm1318 = vcmask 1042432
        %v1319 = vrot.slane %v335, 5
        %v1320 = vrot.slane %v340, 5
        %v1321 = vsel %vm1318, %v1319, %v1320
        %v1322 = vrot.slane %v345, 5
        %v1323 = vsel %vm1318, %v1320, %v1322
        %v1324 = vsel %vm258, %v1321, 0
        %v1326 = vsel %vm258, %v1323, 0
        %1328 = vmatprep.subr.mxu0 0.0
        %1329 = vmatpush1.msra.mxu0 0.0
        %1330 = vmatprep.subr.mxu0 0.0
        %1331 = vmatpush1.msra.mxu0 0.0
        %1332 = vmatprep.subr.mxu0 0.0
        %1333 = vmatpush1.msra.mxu0 0.0
        %1334 = vmatprep.subr.mxu0 0.0
        %1335 = vmatpush1.msra.mxu0 0.0
        %1336 = vmatprep.subr.mxu0 0.0
        %1337 = vmatpush1.msra.mxu0 0.0
        %1338 = vmatprep.subr.mxu0 0.0
        %1339 = vmatpush1.msra.mxu0 0.0
        %1340 = vmatprep.subr.mxu0 0.0
        %1341 = vmatpush1.msra.mxu0 0.0
        %1342 = vmatprep.subr.mxu0 0.0
        %1343 = vmatpush1.msra.mxu0 0.0
        %1344 = vmatprep.subr.mxu0 0.0
        %1345 = vmatpush1.msra.mxu0 0.0
        %1346 = vmatprep.subr.mxu0 0.0
        %1347 = vmatpush1.msra.mxu0 0.0
        %1348 = vmatprep.subr.mxu0 0.0
        %1349 = vmatpush1.msra.mxu0 0.0
        %1350 = vmatprep.subr.mxu0 0.0
        %1351 = vmatpush1.msra.mxu0 0.0
        %1352 = vmatprep.subr.mxu0 0.0
        %1353 = vmatpush1.msra.mxu0 0.0
        %1354 = vmatprep.subr.mxu0 0.0
        %1355 = vmatpush1.msra.mxu0 0.0
        %1356 = vmatprep.subr.mxu0 0.0
        %1357 = vmatpush1.msra.mxu0 %v1317
        %1358 = vmatprep.subr.mxu0 0.0
        %1359 = vmatpush1.msra.mxu0 %v1316
        %1360 = vmatprep.subr.mxu0 0.0
        %1361 = vmatpush2.msra.mxu0 0.0
        %1362 = vmatprep.subr.mxu0 0.0
        %1363 = vmatpush2.msra.mxu0 0.0
        %1364 = vmatprep.subr.mxu0 0.0
        %1365 = vmatpush2.msra.mxu0 0.0
        %1366 = vmatprep.subr.mxu0 0.0
        %1367 = vmatpush2.msra.mxu0 0.0
        %1368 = vmatprep.subr.mxu0 0.0
        %1369 = vmatpush2.msra.mxu0 0.0
        %1370 = vmatprep.subr.mxu0 0.0
        %1371 = vmatpush2.msra.mxu0 0.0
        %1372 = vmatprep.subr.mxu0 0.0
        %1373 = vmatpush2.msra.mxu0 0.0
        %1374 = vmatprep.subr.mxu0 0.0
        %1375 = vmatpush2.msra.mxu0 0.0
        %1376 = vmatprep.subr.mxu0 0.0
        %1377 = vmatpush2.msra.mxu0 0.0
        %1378 = vmatprep.subr.mxu0 0.0
        %1379 = vmatpush2.msra.mxu0 0.0
        %1380 = vmatprep.subr.mxu0 0.0
        %1381 = vmatpush2.msra.mxu0 0.0
        %1382 = vmatprep.subr.mxu0 0.0
        %1383 = vmatpush2.msra.mxu0 0.0
        %1384 = vmatprep.subr.mxu0 0.0
        %1385 = vmatpush2.msra.mxu0 0.0
        %1386 = vmatprep.subr.mxu0 0.0
        %1387 = vmatpush2.msra.mxu0 0.0
        %1388 = vmatprep.subr.mxu0 0.0
        %1389 = vmatpush2.msra.mxu0 0.0
        %1390 = vmatprep.subr.mxu0 0.0
        %1391 = vmatpush2.msra.mxu0 0.0
        %1392 = vmatprep.mubr.f32.mxu0 0.0
        %1393 = vmatmul.mubr.f32.gmra.mxu0 %v1324
        %v1394 = vpop.f32.mrf.mxu0
        %v1395 = vadd.f32 0.0, %v1394
        %v1396 = vpop.f32.mrf.mxu0
        %1397 = vmatprep.mubr.f32.mxu0 0.0
        %1398 = vmatmul.mubr.f32.gmra.mxu0 %v1326
        %v1399 = vpop.f32.mrf.mxu0
        %v1400 = vadd.f32 0.0, %v1399
        %v1401 = vpop.f32.mrf.mxu0
        %1402 = vdwg.mxu0
        %v1403 = vadd.f32 %v1224, %v1395
        %v1404 = vadd.f32 %v1225, %v1400
        %s1405 = scalar_lea.vmem [#allocation6], 192
        %v1406 = vld [vmem:[%s1405] sm:$0xff]
        %v1407 = vld [vmem:[%s1405 + $0x8] sm:$0xff]
        %v1408 = vrot.slane %v415, 5
        %v1409 = vrot.slane %v420, 5
        %v1410 = vsel %vm1318, %v1408, %v1409
        %v1411 = vrot.slane %v425, 5
        %v1412 = vsel %vm1318, %v1409, %v1411
        %v1413 = vsel %vm258, %v1410, 0
        %v1415 = vsel %vm258, %v1412, 0
        %1417 = vmatprep.subr.mxu0 0.0
        %1418 = vmatpush1.msra.mxu0 0.0
        %1419 = vmatprep.subr.mxu0 0.0
        %1420 = vmatpush1.msra.mxu0 0.0
        %1421 = vmatprep.subr.mxu0 0.0
        %1422 = vmatpush1.msra.mxu0 0.0
        %1423 = vmatprep.subr.mxu0 0.0
        %1424 = vmatpush1.msra.mxu0 0.0
        %1425 = vmatprep.subr.mxu0 0.0
        %1426 = vmatpush1.msra.mxu0 0.0
        %1427 = vmatprep.subr.mxu0 0.0
        %1428 = vmatpush1.msra.mxu0 0.0
        %1429 = vmatprep.subr.mxu0 0.0
        %1430 = vmatpush1.msra.mxu0 0.0
        %1431 = vmatprep.subr.mxu0 0.0
        %1432 = vmatpush1.msra.mxu0 0.0
        %1433 = vmatprep.subr.mxu0 0.0
        %1434 = vmatpush1.msra.mxu0 0.0
        %1435 = vmatprep.subr.mxu0 0.0
        %1436 = vmatpush1.msra.mxu0 0.0
        %1437 = vmatprep.subr.mxu0 0.0
        %1438 = vmatpush1.msra.mxu0 0.0
        %1439 = vmatprep.subr.mxu0 0.0
        %1440 = vmatpush1.msra.mxu0 0.0
        %1441 = vmatprep.subr.mxu0 0.0
        %1442 = vmatpush1.msra.mxu0 0.0
        %1443 = vmatprep.subr.mxu0 0.0
        %1444 = vmatpush1.msra.mxu0 0.0
        %1445 = vmatprep.subr.mxu0 0.0
        %1446 = vmatpush1.msra.mxu0 %v1407
        %1447 = vmatprep.subr.mxu0 0.0
        %1448 = vmatpush1.msra.mxu0 %v1406
        %1449 = vmatprep.subr.mxu0 0.0
        %1450 = vmatpush2.msra.mxu0 0.0
        %1451 = vmatprep.subr.mxu0 0.0
        %1452 = vmatpush2.msra.mxu0 0.0
        %1453 = vmatprep.subr.mxu0 0.0
        %1454 = vmatpush2.msra.mxu0 0.0
        %1455 = vmatprep.subr.mxu0 0.0
        %1456 = vmatpush2.msra.mxu0 0.0
        %1457 = vmatprep.subr.mxu0 0.0
        %1458 = vmatpush2.msra.mxu0 0.0
        %1459 = vmatprep.subr.mxu0 0.0
        %1460 = vmatpush2.msra.mxu0 0.0
        %1461 = vmatprep.subr.mxu0 0.0
        %1462 = vmatpush2.msra.mxu0 0.0
        %1463 = vmatprep.subr.mxu0 0.0
        %1464 = vmatpush2.msra.mxu0 0.0
        %1465 = vmatprep.subr.mxu0 0.0
        %1466 = vmatpush2.msra.mxu0 0.0
        %1467 = vmatprep.subr.mxu0 0.0
        %1468 = vmatpush2.msra.mxu0 0.0
        %1469 = vmatprep.subr.mxu0 0.0
        %1470 = vmatpush2.msra.mxu0 0.0
        %1471 = vmatprep.subr.mxu0 0.0
        %1472 = vmatpush2.msra.mxu0 0.0
        %1473 = vmatprep.subr.mxu0 0.0
        %1474 = vmatpush2.msra.mxu0 0.0
        %1475 = vmatprep.subr.mxu0 0.0
        %1476 = vmatpush2.msra.mxu0 0.0
        %1477 = vmatprep.subr.mxu0 0.0
        %1478 = vmatpush2.msra.mxu0 0.0
        %1479 = vmatprep.subr.mxu0 0.0
        %1480 = vmatpush2.msra.mxu0 0.0
        %1481 = vmatprep.mubr.f32.mxu0 0.0
        %1482 = vmatmul.mubr.f32.gmra.mxu0 %v1413
        %v1483 = vpop.f32.mrf.mxu0
        %v1484 = vadd.f32 0.0, %v1483
        %v1485 = vpop.f32.mrf.mxu0
        %1486 = vmatprep.mubr.f32.mxu0 0.0
        %1487 = vmatmul.mubr.f32.gmra.mxu0 %v1415
        %v1488 = vpop.f32.mrf.mxu0
        %v1489 = vadd.f32 0.0, %v1488
        %v1490 = vpop.f32.mrf.mxu0
        %1491 = vdwg.mxu0
        %v1492 = vadd.f32 %v1313, %v1484
        %v1493 = vadd.f32 %v1314, %v1489
        %s1494 = scalar_lea.vmem [#allocation6], 96
        %v1495 = vld [vmem:[%s1494] sm:$0xff]
        %v1496 = vld [vmem:[%s1494 + $0x8] sm:$0xff]
        %vm1497 = vcmask 1041408
        %v1498 = vrot.slane %v335, 6
        %v1499 = vrot.slane %v340, 6
        %v1500 = vsel %vm1497, %v1498, %v1499
        %v1501 = vrot.slane %v345, 6
        %v1502 = vsel %vm1497, %v1499, %v1501
        %v1503 = vsel %vm258, %v1500, 0
        %v1505 = vsel %vm258, %v1502, 0
        %1507 = vmatprep.subr.mxu0 0.0
        %1508 = vmatpush1.msra.mxu0 0.0
        %1509 = vmatprep.subr.mxu0 0.0
        %1510 = vmatpush1.msra.mxu0 0.0
        %1511 = vmatprep.subr.mxu0 0.0
        %1512 = vmatpush1.msra.mxu0 0.0
        %1513 = vmatprep.subr.mxu0 0.0
        %1514 = vmatpush1.msra.mxu0 0.0
        %1515 = vmatprep.subr.mxu0 0.0
        %1516 = vmatpush1.msra.mxu0 0.0
        %1517 = vmatprep.subr.mxu0 0.0
        %1518 = vmatpush1.msra.mxu0 0.0
        %1519 = vmatprep.subr.mxu0 0.0
        %1520 = vmatpush1.msra.mxu0 0.0
        %1521 = vmatprep.subr.mxu0 0.0
        %1522 = vmatpush1.msra.mxu0 0.0
        %1523 = vmatprep.subr.mxu0 0.0
        %1524 = vmatpush1.msra.mxu0 0.0
        %1525 = vmatprep.subr.mxu0 0.0
        %1526 = vmatpush1.msra.mxu0 0.0
        %1527 = vmatprep.subr.mxu0 0.0
        %1528 = vmatpush1.msra.mxu0 0.0
        %1529 = vmatprep.subr.mxu0 0.0
        %1530 = vmatpush1.msra.mxu0 0.0
        %1531 = vmatprep.subr.mxu0 0.0
        %1532 = vmatpush1.msra.mxu0 0.0
        %1533 = vmatprep.subr.mxu0 0.0
        %1534 = vmatpush1.msra.mxu0 0.0
        %1535 = vmatprep.subr.mxu0 0.0
        %1536 = vmatpush1.msra.mxu0 %v1496
        %1537 = vmatprep.subr.mxu0 0.0
        %1538 = vmatpush1.msra.mxu0 %v1495
        %1539 = vmatprep.subr.mxu0 0.0
        %1540 = vmatpush2.msra.mxu0 0.0
        %1541 = vmatprep.subr.mxu0 0.0
        %1542 = vmatpush2.msra.mxu0 0.0
        %1543 = vmatprep.subr.mxu0 0.0
        %1544 = vmatpush2.msra.mxu0 0.0
        %1545 = vmatprep.subr.mxu0 0.0
        %1546 = vmatpush2.msra.mxu0 0.0
        %1547 = vmatprep.subr.mxu0 0.0
        %1548 = vmatpush2.msra.mxu0 0.0
        %1549 = vmatprep.subr.mxu0 0.0
        %1550 = vmatpush2.msra.mxu0 0.0
        %1551 = vmatprep.subr.mxu0 0.0
        %1552 = vmatpush2.msra.mxu0 0.0
        %1553 = vmatprep.subr.mxu0 0.0
        %1554 = vmatpush2.msra.mxu0 0.0
        %1555 = vmatprep.subr.mxu0 0.0
        %1556 = vmatpush2.msra.mxu0 0.0
        %1557 = vmatprep.subr.mxu0 0.0
        %1558 = vmatpush2.msra.mxu0 0.0
        %1559 = vmatprep.subr.mxu0 0.0
        %1560 = vmatpush2.msra.mxu0 0.0
        %1561 = vmatprep.subr.mxu0 0.0
        %1562 = vmatpush2.msra.mxu0 0.0
        %1563 = vmatprep.subr.mxu0 0.0
        %1564 = vmatpush2.msra.mxu0 0.0
        %1565 = vmatprep.subr.mxu0 0.0
        %1566 = vmatpush2.msra.mxu0 0.0
        %1567 = vmatprep.subr.mxu0 0.0
        %1568 = vmatpush2.msra.mxu0 0.0
        %1569 = vmatprep.subr.mxu0 0.0
        %1570 = vmatpush2.msra.mxu0 0.0
        %1571 = vmatprep.mubr.f32.mxu0 0.0
        %1572 = vmatmul.mubr.f32.gmra.mxu0 %v1503
        %v1573 = vpop.f32.mrf.mxu0
        %v1574 = vadd.f32 0.0, %v1573
        %v1575 = vpop.f32.mrf.mxu0
        %1576 = vmatprep.mubr.f32.mxu0 0.0
        %1577 = vmatmul.mubr.f32.gmra.mxu0 %v1505
        %v1578 = vpop.f32.mrf.mxu0
        %v1579 = vadd.f32 0.0, %v1578
        %v1580 = vpop.f32.mrf.mxu0
        %1581 = vdwg.mxu0
        %v1582 = vadd.f32 %v1403, %v1574
        %v1583 = vadd.f32 %v1404, %v1579
        %s1584 = scalar_lea.vmem [#allocation6], 208
        %v1585 = vld [vmem:[%s1584] sm:$0xff]
        %v1586 = vld [vmem:[%s1584 + $0x8] sm:$0xff]
        %v1587 = vrot.slane %v415, 6
        %v1588 = vrot.slane %v420, 6
        %v1589 = vsel %vm1497, %v1587, %v1588
        %v1590 = vrot.slane %v425, 6
        %v1591 = vsel %vm1497, %v1588, %v1590
        %v1592 = vsel %vm258, %v1589, 0
        %v1594 = vsel %vm258, %v1591, 0
        %1596 = vmatprep.subr.mxu0 0.0
        %1597 = vmatpush1.msra.mxu0 0.0
        %1598 = vmatprep.subr.mxu0 0.0
        %1599 = vmatpush1.msra.mxu0 0.0
        %1600 = vmatprep.subr.mxu0 0.0
        %1601 = vmatpush1.msra.mxu0 0.0
        %1602 = vmatprep.subr.mxu0 0.0
        %1603 = vmatpush1.msra.mxu0 0.0
        %1604 = vmatprep.subr.mxu0 0.0
        %1605 = vmatpush1.msra.mxu0 0.0
        %1606 = vmatprep.subr.mxu0 0.0
        %1607 = vmatpush1.msra.mxu0 0.0
        %1608 = vmatprep.subr.mxu0 0.0
        %1609 = vmatpush1.msra.mxu0 0.0
        %1610 = vmatprep.subr.mxu0 0.0
        %1611 = vmatpush1.msra.mxu0 0.0
        %1612 = vmatprep.subr.mxu0 0.0
        %1613 = vmatpush1.msra.mxu0 0.0
        %1614 = vmatprep.subr.mxu0 0.0
        %1615 = vmatpush1.msra.mxu0 0.0
        %1616 = vmatprep.subr.mxu0 0.0
        %1617 = vmatpush1.msra.mxu0 0.0
        %1618 = vmatprep.subr.mxu0 0.0
        %1619 = vmatpush1.msra.mxu0 0.0
        %1620 = vmatprep.subr.mxu0 0.0
        %1621 = vmatpush1.msra.mxu0 0.0
        %1622 = vmatprep.subr.mxu0 0.0
        %1623 = vmatpush1.msra.mxu0 0.0
        %1624 = vmatprep.subr.mxu0 0.0
        %1625 = vmatpush1.msra.mxu0 %v1586
        %1626 = vmatprep.subr.mxu0 0.0
        %1627 = vmatpush1.msra.mxu0 %v1585
        %1628 = vmatprep.subr.mxu0 0.0
        %1629 = vmatpush2.msra.mxu0 0.0
        %1630 = vmatprep.subr.mxu0 0.0
        %1631 = vmatpush2.msra.mxu0 0.0
        %1632 = vmatprep.subr.mxu0 0.0
        %1633 = vmatpush2.msra.mxu0 0.0
        %1634 = vmatprep.subr.mxu0 0.0
        %1635 = vmatpush2.msra.mxu0 0.0
        %1636 = vmatprep.subr.mxu0 0.0
        %1637 = vmatpush2.msra.mxu0 0.0
        %1638 = vmatprep.subr.mxu0 0.0
        %1639 = vmatpush2.msra.mxu0 0.0
        %1640 = vmatprep.subr.mxu0 0.0
        %1641 = vmatpush2.msra.mxu0 0.0
        %1642 = vmatprep.subr.mxu0 0.0
        %1643 = vmatpush2.msra.mxu0 0.0
        %1644 = vmatprep.subr.mxu0 0.0
        %1645 = vmatpush2.msra.mxu0 0.0
        %1646 = vmatprep.subr.mxu0 0.0
        %1647 = vmatpush2.msra.mxu0 0.0
        %1648 = vmatprep.subr.mxu0 0.0
        %1649 = vmatpush2.msra.mxu0 0.0
        %1650 = vmatprep.subr.mxu0 0.0
        %1651 = vmatpush2.msra.mxu0 0.0
        %1652 = vmatprep.subr.mxu0 0.0
        %1653 = vmatpush2.msra.mxu0 0.0
        %1654 = vmatprep.subr.mxu0 0.0
        %1655 = vmatpush2.msra.mxu0 0.0
        %1656 = vmatprep.subr.mxu0 0.0
        %1657 = vmatpush2.msra.mxu0 0.0
        %1658 = vmatprep.subr.mxu0 0.0
        %1659 = vmatpush2.msra.mxu0 0.0
        %1660 = vmatprep.mubr.f32.mxu0 0.0
        %1661 = vmatmul.mubr.f32.gmra.mxu0 %v1592
        %v1662 = vpop.f32.mrf.mxu0
        %v1663 = vadd.f32 0.0, %v1662
        %v1664 = vpop.f32.mrf.mxu0
        %1665 = vmatprep.mubr.f32.mxu0 0.0
        %1666 = vmatmul.mubr.f32.gmra.mxu0 %v1594
        %v1667 = vpop.f32.mrf.mxu0
        %v1668 = vadd.f32 0.0, %v1667
        %v1669 = vpop.f32.mrf.mxu0
        %1670 = vdwg.mxu0
        %v1671 = vadd.f32 %v1492, %v1663
        %v1672 = vadd.f32 %v1493, %v1668
        %v1673 = vadd.f32 %v1582, %v1671
        %v1674 = vadd.f32 %v1583, %v1672
        %1675 = vst.msk [vmem:[%s231] sm:$0xff] %vm258, %v1673
        %1676 = vst.msk [vmem:[%s231 + $0x8] sm:$0xff] %vm258, %v1674
        %s1677 = sand.u32 %s120, 1
        %s1678 = scalar_lea.sflag [#allocation5], %s1677
        %s1679 = sand.u32 %s120, 1
        %s1680 = smul.addr %s1679, 16
        %s1681 = scalar_lea.vmem [#allocation8], %s1680
        // Predicated region
        $region45: #{tpu_custom_call.1} parent=35 // pred_check
          %p1682 = pneg %p130
        $region46: #{tpu_custom_call.1} parent=35 // pred_check_branch
          %1684 = sbr.rel (%p1682) target = $region48
        $region47: #{tpu_custom_call.1} parent=35 // pred_region
          %s1686 = ssub.s32 256, 256
          %1687 = vsyncadd %s1678, %s1686
          %s1688 = smul.addr %s23, 2
          %s1689 = smul.addr %s1688, 128
          %s1690 = scalar_lea.hbm %s4, %s1689
          %s1691 = sshll.u32 %s1681, 4
          %s1692 = int_to_ptr.vmem [resolvable:$true] %s1691
          %1697 = dma.vmem_to_hbm [thread:$0]  %s1692, 256, %s1690, %s1678, 128, 128, 8
        $region48: #{tpu_custom_call.1} parent=35 // pred_fallthru
          _
      $region36: #{tpu_custom_call.1} parent=5 // pred_fallthru
        _
      %p1698 = scmp.le.s32.totalorder 2, %s18
      // Predicated region
      $region49: #{tpu_custom_call.1} parent=5 // pred_check
        %p1699 = pneg %p1698
      $region50: #{tpu_custom_call.1} parent=5 // pred_check_branch
        %1701 = sbr.rel (%p1699) target = $region52
      $region51: #{tpu_custom_call.1} parent=5 // pred_region
        %s1702 = ssub.s32 %s18, 2
        // Predicated region
        $region53: #{tpu_custom_call.1} parent=51 // pred_check
          %p1703 = pneg %p136
        $region54: #{tpu_custom_call.1} parent=51 // pred_check_branch
          %1705 = sbr.rel (%p1703) target = $region56
        $region55: #{tpu_custom_call.1} parent=51 // pred_region
          %s1706 = sand.u32 %s121, 1
          %s1707 = scalar_lea.sflag [#allocation5], %s1706
          %s1708 = sand.u32 %s121, 1
          %s1709 = smul.addr %s1708, 16
          %s1710 = scalar_lea.vmem [#allocation8], %s1709
          %1711 = dma.done %s1707, 256
        $region56: #{tpu_custom_call.1} parent=51 // pred_fallthru
          _
      $region52: #{tpu_custom_call.1} parent=5 // pred_fallthru
        _
    $region6: #{tpu_custom_call.1} parent=1 // loop_footer
      %s22 = sadd.s32 1, %s18
    $region7: #{tpu_custom_call.1} parent=1 // loop_footer_branch
      %17 = sbr.rel target = $region3
    $region8: #{tpu_custom_call.1} parent=1 // loop_exit
      _
    %1712 = vsyncpa [#allocation4], 1
    %s1713 = scalar_lea.sflag [#allocation4], 1
    %1714 = vsyncpa %s1713, 1
    %1715 = vsyncpa [#allocation7], 1
    %1716 = vsyncpa [#allocation5], 1
    %s1717 = scalar_lea.sflag [#allocation5], 1
    %1718 = vsyncpa %s1717, 1

</llo_original>
